<compile_context>
chip_gen: v6e
topology: v6e:2x2x1
jax: 0.10.0
libtpu: 0.0.40
codegen_flags: <defaults>
</compile_context>

<pallas_src>
import jax
import jax.numpy as jnp
from jax.experimental import pallas as pl
from jax.experimental.pallas import tpu as pltpu

# ------------------------- configuration (small shapes) -------------------------
VOCAB     = 64
POS_NUM   = 32
WORD_DIM  = 16
POS_DIM   = 4
EMB_DIM   = WORD_DIM + 2 * POS_DIM        # 24
KERNEL    = 3                             # conv window of PCNN
PAD       = (KERNEL - 1) // 2             # 'same' padding = 1
HIDDEN    = 32                            # conv filters
ENC_DIM   = 3 * HIDDEN                    # 96 : piecewise (3-piece) max pooling
NUM_REL   = 4
SEQ       = 16
BATCH     = 8                             # total sentences
BAG_SIZE  = 4                             # fixed bag size (scope = equal bags)
NUM_BAGS  = BATCH // BAG_SIZE


# ------------------------------ fused Pallas kernel ------------------------------
def fused_model_kernel(emb_ref, w_ref, b_ref, mask_ref, relT_ref, bias_ref, out_ref):
    """Fused PCNN encoder + bag-level selective attention (test-time path).

    emb_ref : (BATCH, SEQ + 2*PAD, EMB_DIM) zero-padded embedded inputs
    w_ref   : (KERNEL*EMB_DIM, HIDDEN)      conv weight, tap-major rows
    b_ref   : (1, HIDDEN)                   conv bias
    mask_ref: (BATCH, SEQ, 3)               one-hot piece mask (left/middle/right)
    relT_ref: (ENC_DIM, NUM_REL)            relation query matrix, pre-transposed
    bias_ref: (1, NUM_REL)                  classifier bias
    out_ref : (NUM_BAGS, NUM_REL)           per-bag relation logits
    """
    # ---- PCNN conv: one 128-row MXU problem (3 accumulated taps == im2col) ----
    # NOTE: on v6e/v7x these matmul inputs could be cast to bf16 (keep f32
    # accumulate) for fewer MXU passes; kept f32 to preserve reference numerics.
    acc = jnp.zeros((BATCH * SEQ, HIDDEN), jnp.float32)
    for k in range(KERNEL):                                    # static unroll
        xk = emb_ref[:, pl.ds(k, SEQ), :]                      # (B, SEQ, D) window
        xk = xk.reshape(BATCH * SEQ, EMB_DIM)                  # (128, 24) MXU LHS
        wk = w_ref[pl.ds(k * EMB_DIM, EMB_DIM), :]             # (24, 32), 8-aligned
        acc = acc + jnp.dot(xk, wk, preferred_element_type=jnp.float32)
    conv = (acc + b_ref[...]).reshape(BATCH, SEQ, HIDDEN)      # (B, SEQ, H)

    # ---- piecewise (3-piece) masked max pooling + ReLU ----
    mask = mask_ref[...]                                       # (B, SEQ, 3)
    pieces = []
    for p in range(3):                                         # static unroll
        m = mask[:, :, p:p + 1]                                # (B, SEQ, 1)
        masked = jnp.where(m > 0.0, conv, -1e30)
        pieces.append(jnp.max(masked, axis=1))                 # (B, H)
    rep = jnp.maximum(jnp.concatenate(pieces, axis=-1), 0.0)   # (B, 3H) stays in VMEM
    # TODO(synk): dropout is identity at inference (is_training=False), omitted.

    # ---- bag-level selective attention (test-time per-relation attention) ----
    # raw scores of every sentence against every relation query
    scores = jnp.dot(rep, relT_ref[...],
                     preferred_element_type=jnp.float32)       # (B, R)
    bias = bias_ref[...]                                       # (1, R)
    rows = []
    for b in range(NUM_BAGS):                                  # static unroll (2 bags)
        s = scores[b * BAG_SIZE:(b + 1) * BAG_SIZE, :]         # (BAG, R)
        m = jnp.max(s, axis=0, keepdims=True)
        e = jnp.exp(s - m)
        alpha = e * pl.reciprocal(jnp.sum(e, axis=0, keepdims=True), approx=True)
        # diag(bag_repr @ rel.T)[r] == sum_i alpha[i, r] * scores[i, r]
        rows.append(jnp.sum(alpha * s, axis=0, keepdims=True) + bias)   # (1, R)
    out_ref[...] = jnp.concatenate(rows, axis=0)               # (NUM_BAGS, R)


# ------------------------------- glue (plain JAX) --------------------------------
def embed(word_ids, pos1, pos2, word_tab, pos1_tab, pos2_tab):
    w = jnp.take(word_tab, word_ids, axis=0)                   # (B, L, WORD_DIM)
    p1 = jnp.take(pos1_tab, pos1, axis=0)                      # (B, L, POS_DIM)
    p2 = jnp.take(pos2_tab, pos2, axis=0)                      # (B, L, POS_DIM)
    return jnp.concatenate([w, p1, p2], axis=-1)               # (B, L, EMB_DIM)


@jax.jit
def model_forward(word_ids, pos1, pos2, pcnn_mask, params):
    emb = embed(word_ids, pos1, pos2,
                params['word_tab'], params['pos1_tab'], params['pos2_tab'])
    emb_pad = jnp.pad(emb, ((0, 0), (PAD, PAD), (0, 0)))       # 'same' conv padding

    logits = pl.pallas_call(
        fused_model_kernel,
        out_shape=jax.ShapeDtypeStruct((NUM_BAGS, NUM_REL), jnp.float32),
        grid_spec=pl.GridSpec(
            grid=(1,),
            in_specs=[
                pl.BlockSpec((BATCH, SEQ + 2 * PAD, EMB_DIM), lambda i: (0, 0, 0)),
                pl.BlockSpec((KERNEL * EMB_DIM, HIDDEN), lambda i: (0, 0)),
                pl.BlockSpec((1, HIDDEN), lambda i: (0, 0)),
                pl.BlockSpec((BATCH, SEQ, 3), lambda i: (0, 0, 0)),
                pl.BlockSpec((ENC_DIM, NUM_REL), lambda i: (0, 0)),
                pl.BlockSpec((1, NUM_REL), lambda i: (0, 0)),
            ],
            out_specs=pl.BlockSpec((NUM_BAGS, NUM_REL), lambda i: (0, 0)),
        ),
        compiler_params=pltpu.CompilerParams(dimension_semantics=("arbitrary",)),
    )(emb_pad, params['conv_w'], params['conv_b'], pcnn_mask,
      params['rel_mat_t'], params['rel_bias'])
    return logits


# ----------------------------------- main ----------------------------------------
if __name__ == "__main__":
    key = jax.random.PRNGKey(0)
    ks = jax.random.split(key, 12)

    # deterministic synthetic parameters (shapes implied by the module's __init__)
    rel_mat = 0.1 * jax.random.normal(ks[4], (NUM_REL, ENC_DIM), jnp.float32)
    params = dict(
        word_tab=0.1 * jax.random.normal(ks[0], (VOCAB, WORD_DIM), jnp.float32),
        pos1_tab=0.1 * jax.random.normal(ks[1], (POS_NUM, POS_DIM), jnp.float32),
        pos2_tab=0.1 * jax.random.normal(ks[2], (POS_NUM, POS_DIM), jnp.float32),
        conv_w=0.1 * jax.random.normal(ks[3], (KERNEL * EMB_DIM, HIDDEN), jnp.float32),
        conv_b=jnp.zeros((1, HIDDEN), jnp.float32),
        # relation matrix pre-transposed once (free layout plumbing for the kernel)
        rel_mat_t=rel_mat.T,                                   # (ENC_DIM, NUM_REL)
        rel_bias=jnp.zeros((1, NUM_REL), jnp.float32),
    )

    # deterministic synthetic inputs
    word_ids = jax.random.randint(ks[5], (BATCH, SEQ), 0, VOCAB)
    pos1 = jax.random.randint(ks[6], (BATCH, SEQ), 0, POS_NUM)
    pos2 = jax.random.randint(ks[7], (BATCH, SEQ), 0, POS_NUM)

    # piecewise mask from two entity positions per sentence (3 pieces, one-hot)
    e1 = jax.random.randint(ks[8], (BATCH,), 1, SEQ // 2)
    e2 = jax.random.randint(ks[9], (BATCH,), SEQ // 2, SEQ - 1)
    pos_idx = jnp.arange(SEQ)[None, :]
    piece = (pos_idx > e1[:, None]).astype(jnp.int32) + \
            (pos_idx > e2[:, None]).astype(jnp.int32)          # values in {0,1,2}
    pcnn_mask = jax.nn.one_hot(piece, 3, dtype=jnp.float32)    # (B, L, 3)

    # scope: NUM_BAGS bags of BAG_SIZE consecutive sentences each (fixed-size bags)
    logits = model_forward(word_ids, pos1, pos2, pcnn_mask, params)
    jax.block_until_ready(logits)
    assert logits.shape == (NUM_BAGS, NUM_REL)
    print("KERNEL_OK")
</pallas_src>

<mosaic_0001>
module attributes {stable_mosaic.version = 11 : i64} {
  func.func @fused_model_kernel(%arg0: i32, %arg1: memref<8x18x24xf32, #tpu.memory_space<vmem>>, %arg2: memref<72x32xf32, #tpu.memory_space<vmem>>, %arg3: memref<1x32xf32, #tpu.memory_space<vmem>>, %arg4: memref<8x16x3xf32, #tpu.memory_space<vmem>>, %arg5: memref<96x4xf32, #tpu.memory_space<vmem>>, %arg6: memref<1x4xf32, #tpu.memory_space<vmem>>, %arg7: memref<2x4xf32, #tpu.memory_space<vmem>>) attributes {dimension_semantics = [#tpu.dimension_semantics<arbitrary>], iteration_bounds = array<i64: 1>, scalar_prefetch = 0 : i64, scratch_operands = 0 : i64, tpu.core_type = #tpu.core_type<tc>, window_params = [{pipeline_mode = #tpu.pipeline_mode<synchronous>, transform_indices = @transform_0, window_bounds = array<i64: 8, 18, 24>}, {pipeline_mode = #tpu.pipeline_mode<synchronous>, transform_indices = @transform_1, window_bounds = array<i64: 72, 32>}, {pipeline_mode = #tpu.pipeline_mode<synchronous>, transform_indices = @transform_2, window_bounds = array<i64: 1, 32>}, {pipeline_mode = #tpu.pipeline_mode<synchronous>, transform_indices = @transform_3, window_bounds = array<i64: 8, 16, 3>}, {pipeline_mode = #tpu.pipeline_mode<synchronous>, transform_indices = @transform_4, window_bounds = array<i64: 96, 4>}, {pipeline_mode = #tpu.pipeline_mode<synchronous>, transform_indices = @transform_5, window_bounds = array<i64: 1, 4>}, {pipeline_mode = #tpu.pipeline_mode<synchronous>, transform_indices = @transform_6, window_bounds = array<i64: 2, 4>}]} {
    %cst = arith.constant 0.000000e+00 : f32
    %0 = vector.broadcast %cst : f32 to vector<128x32xf32>
    %c0 = arith.constant 0 : index
    %c0_0 = arith.constant 0 : index
    %c0_1 = arith.constant 0 : index
    %1 = vector.load %arg1[%c0, %c0_0, %c0_1] : memref<8x18x24xf32, #tpu.memory_space<vmem>>, vector<8x16x24xf32>
    %2 = vector.shape_cast %1 : vector<8x16x24xf32> to vector<128x24xf32>
    %c0_2 = arith.constant 0 : index
    %c0_3 = arith.constant 0 : index
    %3 = vector.load %arg2[%c0_2, %c0_3] : memref<72x32xf32, #tpu.memory_space<vmem>>, vector<24x32xf32>
    %cst_4 = arith.constant dense<0.000000e+00> : vector<128x32xf32>
    %4 = tpu.matmul %2, %3, %cst_4 {dimension_numbers = #tpu.dot_dimension_numbers<[1], [0], [0], [1], [0, 0, 1, 1], [], []>} : vector<128x24xf32>, vector<24x32xf32>, vector<128x32xf32> -> vector<128x32xf32>
    %5 = arith.addf %0, %4 : vector<128x32xf32>
    %c0_5 = arith.constant 0 : index
    %c1 = arith.constant 1 : index
    %c0_6 = arith.constant 0 : index
    %6 = vector.load %arg1[%c0_5, %c1, %c0_6] : memref<8x18x24xf32, #tpu.memory_space<vmem>>, vector<8x16x24xf32>
    %7 = vector.shape_cast %6 : vector<8x16x24xf32> to vector<128x24xf32>
    %c24 = arith.constant 24 : index
    %c0_7 = arith.constant 0 : index
    %8 = vector.load %arg2[%c24, %c0_7] : memref<72x32xf32, #tpu.memory_space<vmem>>, vector<24x32xf32>
    %cst_8 = arith.constant dense<0.000000e+00> : vector<128x32xf32>
    %9 = tpu.matmul %7, %8, %cst_8 {dimension_numbers = #tpu.dot_dimension_numbers<[1], [0], [0], [1], [0, 0, 1, 1], [], []>} : vector<128x24xf32>, vector<24x32xf32>, vector<128x32xf32> -> vector<128x32xf32>
    %10 = arith.addf %5, %9 : vector<128x32xf32>
    %c0_9 = arith.constant 0 : index
    %c2 = arith.constant 2 : index
    %c0_10 = arith.constant 0 : index
    %11 = vector.load %arg1[%c0_9, %c2, %c0_10] : memref<8x18x24xf32, #tpu.memory_space<vmem>>, vector<8x16x24xf32>
    %12 = vector.shape_cast %11 : vector<8x16x24xf32> to vector<128x24xf32>
    %c48 = arith.constant 48 : index
    %c0_11 = arith.constant 0 : index
    %13 = vector.load %arg2[%c48, %c0_11] : memref<72x32xf32, #tpu.memory_space<vmem>>, vector<24x32xf32>
    %cst_12 = arith.constant dense<0.000000e+00> : vector<128x32xf32>
    %14 = tpu.matmul %12, %13, %cst_12 {dimension_numbers = #tpu.dot_dimension_numbers<[1], [0], [0], [1], [0, 0, 1, 1], [], []>} : vector<128x24xf32>, vector<24x32xf32>, vector<128x32xf32> -> vector<128x32xf32>
    %15 = arith.addf %10, %14 : vector<128x32xf32>
    %c0_13 = arith.constant 0 : index
    %c0_14 = arith.constant 0 : index
    %16 = vector.load %arg3[%c0_13, %c0_14] : memref<1x32xf32, #tpu.memory_space<vmem>>, vector<1x32xf32>
    %17 = vector.broadcast %16 : vector<1x32xf32> to vector<128x32xf32>
    %18 = arith.addf %15, %17 : vector<128x32xf32>
    %19 = vector.shape_cast %18 : vector<128x32xf32> to vector<8x16x32xf32>
    %c0_15 = arith.constant 0 : index
    %c0_16 = arith.constant 0 : index
    %c0_17 = arith.constant 0 : index
    %20 = vector.load %arg4[%c0_15, %c0_16, %c0_17] : memref<8x16x3xf32, #tpu.memory_space<vmem>>, vector<8x16x3xf32>
    %21 = vector.extract_strided_slice %20 {offsets = [0, 0, 0], sizes = [8, 16, 1], strides = [1, 1, 1]} : vector<8x16x3xf32> to vector<8x16x1xf32>
    %cst_18 = arith.constant 0.000000e+00 : f32
    %22 = vector.broadcast %cst_18 : f32 to vector<8x16x1xf32>
    %23 = arith.cmpf ogt, %21, %22 : vector<8x16x1xf32>
    %cst_19 = arith.constant -1.000000e+30 : f32
    %24 = vector.shape_cast %23 : vector<8x16x1xi1> to vector<8x16x1xi1>
    %25 = vector.broadcast %24 : vector<8x16x1xi1> to vector<8x16x32xi1>
    %26 = vector.broadcast %cst_19 : f32 to vector<8x16x32xf32>
    %27 = arith.select %25, %19, %26 : vector<8x16x32xi1>, vector<8x16x32xf32>
    %cst_20 = arith.constant dense<0xFF800000> : vector<8x32xf32>
    %28 = vector.multi_reduction <maximumf>, %27, %cst_20 [1] : vector<8x16x32xf32> to vector<8x32xf32>
    %29 = vector.extract_strided_slice %20 {offsets = [0, 0, 1], sizes = [8, 16, 1], strides = [1, 1, 1]} : vector<8x16x3xf32> to vector<8x16x1xf32>
    %cst_21 = arith.constant 0.000000e+00 : f32
    %30 = vector.broadcast %cst_21 : f32 to vector<8x16x1xf32>
    %31 = arith.cmpf ogt, %29, %30 : vector<8x16x1xf32>
    %cst_22 = arith.constant -1.000000e+30 : f32
    %32 = vector.shape_cast %31 : vector<8x16x1xi1> to vector<8x16x1xi1>
    %33 = vector.broadcast %32 : vector<8x16x1xi1> to vector<8x16x32xi1>
    %34 = vector.broadcast %cst_22 : f32 to vector<8x16x32xf32>
    %35 = arith.select %33, %19, %34 : vector<8x16x32xi1>, vector<8x16x32xf32>
    %cst_23 = arith.constant dense<0xFF800000> : vector<8x32xf32>
    %36 = vector.multi_reduction <maximumf>, %35, %cst_23 [1] : vector<8x16x32xf32> to vector<8x32xf32>
    %37 = vector.extract_strided_slice %20 {offsets = [0, 0, 2], sizes = [8, 16, 1], strides = [1, 1, 1]} : vector<8x16x3xf32> to vector<8x16x1xf32>
    %cst_24 = arith.constant 0.000000e+00 : f32
    %38 = vector.broadcast %cst_24 : f32 to vector<8x16x1xf32>
    %39 = arith.cmpf ogt, %37, %38 : vector<8x16x1xf32>
    %cst_25 = arith.constant -1.000000e+30 : f32
    %40 = vector.shape_cast %39 : vector<8x16x1xi1> to vector<8x16x1xi1>
    %41 = vector.broadcast %40 : vector<8x16x1xi1> to vector<8x16x32xi1>
    %42 = vector.broadcast %cst_25 : f32 to vector<8x16x32xf32>
    %43 = arith.select %41, %19, %42 : vector<8x16x32xi1>, vector<8x16x32xf32>
    %cst_26 = arith.constant dense<0xFF800000> : vector<8x32xf32>
    %44 = vector.multi_reduction <maximumf>, %43, %cst_26 [1] : vector<8x16x32xf32> to vector<8x32xf32>
    %45 = tpu.concatenate %28, %36, %44 in 1 : vector<8x32xf32>, vector<8x32xf32>, vector<8x32xf32> -> vector<8x96xf32>
    %cst_27 = arith.constant 0.000000e+00 : f32
    %46 = vector.broadcast %cst_27 : f32 to vector<8x96xf32>
    %47 = arith.maximumf %45, %46 : vector<8x96xf32>
    %c0_28 = arith.constant 0 : index
    %c0_29 = arith.constant 0 : index
    %48 = vector.load %arg5[%c0_28, %c0_29] : memref<96x4xf32, #tpu.memory_space<vmem>>, vector<96x4xf32>
    %cst_30 = arith.constant dense<0.000000e+00> : vector<8x4xf32>
    %49 = tpu.matmul %47, %48, %cst_30 {dimension_numbers = #tpu.dot_dimension_numbers<[1], [0], [0], [1], [0, 0, 1, 1], [], []>} : vector<8x96xf32>, vector<96x4xf32>, vector<8x4xf32> -> vector<8x4xf32>
    %c0_31 = arith.constant 0 : index
    %c0_32 = arith.constant 0 : index
    %50 = vector.load %arg6[%c0_31, %c0_32] : memref<1x4xf32, #tpu.memory_space<vmem>>, vector<1x4xf32>
    %51 = vector.extract_strided_slice %49 {offsets = [0, 0], sizes = [4, 4], strides = [1, 1]} : vector<8x4xf32> to vector<4x4xf32>
    %cst_33 = arith.constant dense<0xFF800000> : vector<4xf32>
    %52 = vector.multi_reduction <maximumf>, %51, %cst_33 [0] : vector<4x4xf32> to vector<4xf32>
    %53 = vector.shape_cast %52 : vector<4xf32> to vector<1x4xf32>
    %54 = vector.broadcast %53 : vector<1x4xf32> to vector<4x4xf32>
    %55 = arith.subf %51, %54 : vector<4x4xf32>
    %56 = math.exp %55 : vector<4x4xf32>
    %cst_34 = arith.constant dense<0.000000e+00> : vector<4xf32>
    %57 = vector.multi_reduction <add>, %56, %cst_34 [0] : vector<4x4xf32> to vector<4xf32>
    %58 = vector.shape_cast %57 : vector<4xf32> to vector<1x4xf32>
    %59 = tpu.reciprocal %58 {approx = true} : vector<1x4xf32> -> vector<1x4xf32>
    %60 = vector.broadcast %59 : vector<1x4xf32> to vector<4x4xf32>
    %61 = arith.mulf %56, %60 : vector<4x4xf32>
    %62 = arith.mulf %61, %51 : vector<4x4xf32>
    %cst_35 = arith.constant dense<0.000000e+00> : vector<4xf32>
    %63 = vector.multi_reduction <add>, %62, %cst_35 [0] : vector<4x4xf32> to vector<4xf32>
    %64 = vector.shape_cast %63 : vector<4xf32> to vector<1x4xf32>
    %65 = arith.addf %64, %50 : vector<1x4xf32>
    %66 = vector.extract_strided_slice %49 {offsets = [4, 0], sizes = [4, 4], strides = [1, 1]} : vector<8x4xf32> to vector<4x4xf32>
    %cst_36 = arith.constant dense<0xFF800000> : vector<4xf32>
    %67 = vector.multi_reduction <maximumf>, %66, %cst_36 [0] : vector<4x4xf32> to vector<4xf32>
    %68 = vector.shape_cast %67 : vector<4xf32> to vector<1x4xf32>
    %69 = vector.broadcast %68 : vector<1x4xf32> to vector<4x4xf32>
    %70 = arith.subf %66, %69 : vector<4x4xf32>
    %71 = math.exp %70 : vector<4x4xf32>
    %cst_37 = arith.constant dense<0.000000e+00> : vector<4xf32>
    %72 = vector.multi_reduction <add>, %71, %cst_37 [0] : vector<4x4xf32> to vector<4xf32>
    %73 = vector.shape_cast %72 : vector<4xf32> to vector<1x4xf32>
    %74 = tpu.reciprocal %73 {approx = true} : vector<1x4xf32> -> vector<1x4xf32>
    %75 = vector.broadcast %74 : vector<1x4xf32> to vector<4x4xf32>
    %76 = arith.mulf %71, %75 : vector<4x4xf32>
    %77 = arith.mulf %76, %66 : vector<4x4xf32>
    %cst_38 = arith.constant dense<0.000000e+00> : vector<4xf32>
    %78 = vector.multi_reduction <add>, %77, %cst_38 [0] : vector<4x4xf32> to vector<4xf32>
    %79 = vector.shape_cast %78 : vector<4xf32> to vector<1x4xf32>
    %80 = arith.addf %79, %50 : vector<1x4xf32>
    %81 = tpu.concatenate %65, %80 in 0 : vector<1x4xf32>, vector<1x4xf32> -> vector<2x4xf32>
    %c0_39 = arith.constant 0 : index
    %c0_40 = arith.constant 0 : index
    %82 = vector.load %arg7[%c0_39, %c0_40] : memref<2x4xf32, #tpu.memory_space<vmem>>, vector<2x4xf32>
    tpu.vector_store %arg7[%c0_39, %c0_40], %81 {strides = array<i32>} : memref<2x4xf32, #tpu.memory_space<vmem>>, vector<2x4xf32>,
    return
  }
  func.func @transform_0(%arg0: i32) -> (i32, i32, i32) {
    %c0_i32 = arith.constant 0 : i32
    %c0_i32_0 = arith.constant 0 : i32
    %c0_i32_1 = arith.constant 0 : i32
    %c0_i32_2 = arith.constant 0 : i32
    return %c0_i32, %c0_i32_0, %c0_i32_1 : i32, i32, i32
  }
  func.func @transform_1(%arg0: i32) -> (i32, i32) {
    %c0_i32 = arith.constant 0 : i32
    %c0_i32_0 = arith.constant 0 : i32
    %c0_i32_1 = arith.constant 0 : i32
    return %c0_i32, %c0_i32_0 : i32, i32
  }
  func.func @transform_2(%arg0: i32) -> (i32, i32) {
    %c0_i32 = arith.constant 0 : i32
    %c0_i32_0 = arith.constant 0 : i32
    %c0_i32_1 = arith.constant 0 : i32
    return %c0_i32, %c0_i32_0 : i32, i32
  }
  func.func @transform_3(%arg0: i32) -> (i32, i32, i32) {
    %c0_i32 = arith.constant 0 : i32
    %c0_i32_0 = arith.constant 0 : i32
    %c0_i32_1 = arith.constant 0 : i32
    %c0_i32_2 = arith.constant 0 : i32
    return %c0_i32, %c0_i32_0, %c0_i32_1 : i32, i32, i32
  }
  func.func @transform_4(%arg0: i32) -> (i32, i32) {
    %c0_i32 = arith.constant 0 : i32
    %c0_i32_0 = arith.constant 0 : i32
    %c0_i32_1 = arith.constant 0 : i32
    return %c0_i32, %c0_i32_0 : i32, i32
  }
  func.func @transform_5(%arg0: i32) -> (i32, i32) {
    %c0_i32 = arith.constant 0 : i32
    %c0_i32_0 = arith.constant 0 : i32
    %c0_i32_1 = arith.constant 0 : i32
    return %c0_i32, %c0_i32_0 : i32, i32
  }
  func.func @transform_6(%arg0: i32) -> (i32, i32) {
    %c0_i32 = arith.constant 0 : i32
    %c0_i32_0 = arith.constant 0 : i32
    %c0_i32_1 = arith.constant 0 : i32
    return %c0_i32, %c0_i32_0 : i32, i32
  }
}

</mosaic_0001>

<llo_original>
// kernel: model_forward.1
$region0: #{model_forward.1}
  #allocation0 [shape = 'u32[]', space=smem, size = 0x4, offset = 0x4, fixed_abs, tag = 'smem constant byte address 0x4 - core index']
  #allocation1 [shape = 'u32[144,128]{1,0:T(1,128)}', space=vmem, size = 0x12000, scoped, tag = 'internal scratch']
  %s0 = inlined_call_operand.vmem [shape: f32[8,18,24], index: 0, kind: input, shape index: {}]
  %s1 = inlined_call_operand.vmem [shape: f32[72,32], index: 1, kind: input, shape index: {}]
  %s2 = inlined_call_operand.vmem [shape: f32[1,32], index: 2, kind: input, shape index: {}]
  %s3 = inlined_call_operand.vmem [shape: f32[8,16,3], index: 3, kind: input, shape index: {}]
  %s4 = inlined_call_operand.vmem [shape: f32[96,4], index: 4, kind: input, shape index: {}]
  %s5 = inlined_call_operand.vmem [shape: f32[1,4], index: 5, kind: input, shape index: {}]
  %s6 = inlined_call_operand.hbm [shape: f32[2,4], index: 6, kind: output, shape index: {}]
  %s7 = sld [smem:[#allocation0]]
  $region34: #{model_forward.1} parent=0
    _
  %s9 = ssub.s32 1, %s7
  %s10 = scalar_select 0, %s9, %s7
  $region1: #{model_forward.1} parent=0
    #allocation2 [shape = 'u8[1024]{0}', space=vmem, size = 0x400, scoped, tag = 'output window, operand 0, single buffered']
    #allocation3 [shape = 's32[1]{0}', space=sflag, size = 0x4, scoped, tag = 'scoped memory for model_forward.1']
    %11 = vsyncpa [#allocation3], 0
    // Predicated region
    $region2: #{model_forward.1} parent=1 // pred_check
      _
    $region3: #{model_forward.1} parent=1 // pred_check_branch
      %13 = sbr.rel (0) target = $region5
    $region4: #{model_forward.1} parent=1 // pred_region
      _
    $region5: #{model_forward.1} parent=1 // pred_fallthru
      _
    // Predicated region
    $region6: #{model_forward.1} parent=1 // pred_check
      _
    $region7: #{model_forward.1} parent=1 // pred_check_branch
      %15 = sbr.rel (0) target = $region9
    $region8: #{model_forward.1} parent=1 // pred_region
      _
    $region9: #{model_forward.1} parent=1 // pred_fallthru
      _
    // Predicated region
    $region10: #{model_forward.1} parent=1 // pred_check
      _
    $region11: #{model_forward.1} parent=1 // pred_check_branch
      %17 = sbr.rel (0) target = $region13
    $region12: #{model_forward.1} parent=1 // pred_region
      _
    $region13: #{model_forward.1} parent=1 // pred_fallthru
      _
    // Predicated region
    $region14: #{model_forward.1} parent=1 // pred_check
      _
    $region15: #{model_forward.1} parent=1 // pred_check_branch
      %19 = sbr.rel (0) target = $region17
    $region16: #{model_forward.1} parent=1 // pred_region
      _
    $region17: #{model_forward.1} parent=1 // pred_fallthru
      _
    // Predicated region
    $region18: #{model_forward.1} parent=1 // pred_check
      _
    $region19: #{model_forward.1} parent=1 // pred_check_branch
      %21 = sbr.rel (0) target = $region21
    $region20: #{model_forward.1} parent=1 // pred_region
      _
    $region21: #{model_forward.1} parent=1 // pred_fallthru
      _
    // Predicated region
    $region22: #{model_forward.1} parent=1 // pred_check
      _
    $region23: #{model_forward.1} parent=1 // pred_check_branch
      %23 = sbr.rel (0) target = $region25
    $region24: #{model_forward.1} parent=1 // pred_region
      _
    $region25: #{model_forward.1} parent=1 // pred_fallthru
      _
    %v24 = vld [vmem:[%s0] sm:$0xff]
    %v25 = vld [vmem:[%s0 + $0x8] sm:$0xff]
    %v26 = vld [vmem:[%s0 + $0x18] sm:$0xff]
    %v27 = vld [vmem:[%s0 + $0x20] sm:$0xff]
    %v28 = vld [vmem:[%s0 + $0x30] sm:$0xff]
    %v29 = vld [vmem:[%s0 + $0x38] sm:$0xff]
    %v30 = vld [vmem:[%s0 + $0x48] sm:$0xff]
    %v31 = vld [vmem:[%s0 + $0x50] sm:$0xff]
    %v32 = vld [vmem:[%s0 + $0x60] sm:$0xff]
    %v33 = vld [vmem:[%s0 + $0x68] sm:$0xff]
    %v34 = vld [vmem:[%s0 + $0x78] sm:$0xff]
    %v35 = vld [vmem:[%s0 + $0x80] sm:$0xff]
    %v36 = vld [vmem:[%s0 + $0x90] sm:$0xff]
    %v37 = vld [vmem:[%s0 + $0x98] sm:$0xff]
    %v38 = vld [vmem:[%s0 + $0xa8] sm:$0xff]
    %v39 = vld [vmem:[%s0 + $0xb0] sm:$0xff]
    %v40 = vld [vmem:[%s1] sm:$0xff]
    %v41 = vld [vmem:[%s1 + $0x8] sm:$0xff]
    %v42 = vld [vmem:[%s1 + $0x10] sm:$0xff]
    %v43 = vld [vmem:[%s0 + $0x1] sm:$0xff]
    %v44 = vld [vmem:[%s0 + $0x9] sm:$0xff]
    %v45 = vld [vmem:[%s0 + $0x19] sm:$0xff]
    %v46 = vld [vmem:[%s0 + $0x21] sm:$0xff]
    %v47 = vld [vmem:[%s0 + $0x31] sm:$0xff]
    %v48 = vld [vmem:[%s0 + $0x39] sm:$0xff]
    %v49 = vld [vmem:[%s0 + $0x49] sm:$0xff]
    %v50 = vld [vmem:[%s0 + $0x51] sm:$0xff]
    %v51 = vld [vmem:[%s0 + $0x61] sm:$0xff]
    %v52 = vld [vmem:[%s0 + $0x69] sm:$0xff]
    %v53 = vld [vmem:[%s0 + $0x79] sm:$0xff]
    %v54 = vld [vmem:[%s0 + $0x81] sm:$0xff]
    %v55 = vld [vmem:[%s0 + $0x91] sm:$0xff]
    %v56 = vld [vmem:[%s0 + $0x99] sm:$0xff]
    %v57 = vld [vmem:[%s0 + $0xa9] sm:$0xff]
    %v58 = vld [vmem:[%s0 + $0xb1] sm:$0xff]
    %v59 = vld [vmem:[%s1 + $0x18] sm:$0xff]
    %v60 = vld [vmem:[%s1 + $0x20] sm:$0xff]
    %v61 = vld [vmem:[%s1 + $0x28] sm:$0xff]
    %vm62 = vcmask 195584
    %v64 = vsel %vm62, %v43, 0
    %v67 = vsel %vm62, %v44, 0
    %v70 = vsel %vm62, %v45, 0
    %v73 = vsel %vm62, %v46, 0
    %v76 = vsel %vm62, %v47, 0
    %v79 = vsel %vm62, %v48, 0
    %v82 = vsel %vm62, %v49, 0
    %v85 = vsel %vm62, %v50, 0
    %v88 = vsel %vm62, %v51, 0
    %v91 = vsel %vm62, %v52, 0
    %v94 = vsel %vm62, %v53, 0
    %v97 = vsel %vm62, %v54, 0
    %v100 = vsel %vm62, %v55, 0
    %v103 = vsel %vm62, %v56, 0
    %v106 = vsel %vm62, %v57, 0
    %v109 = vsel %vm62, %v58, 0
    %111 = vmatprep.subr.mxu0 0.0
    %112 = vmatpush1.msra.mxu0 0.0
    %113 = vmatprep.subr.mxu0 0.0
    %114 = vmatpush1.msra.mxu0 0.0
    %115 = vmatprep.subr.mxu0 0.0
    %116 = vmatpush1.msra.mxu0 0.0
    %117 = vmatprep.subr.mxu0 0.0
    %118 = vmatpush1.msra.mxu0 0.0
    %119 = vmatprep.subr.mxu0 0.0
    %120 = vmatpush1.msra.mxu0 0.0
    %121 = vmatprep.subr.mxu0 0.0
    %122 = vmatpush1.msra.mxu0 0.0
    %123 = vmatprep.subr.mxu0 0.0
    %124 = vmatpush1.msra.mxu0 0.0
    %125 = vmatprep.subr.mxu0 0.0
    %126 = vmatpush1.msra.mxu0 0.0
    %127 = vmatprep.subr.mxu0 0.0
    %128 = vmatpush1.msra.mxu0 0.0
    %129 = vmatprep.subr.mxu0 0.0
    %130 = vmatpush1.msra.mxu0 0.0
    %131 = vmatprep.subr.mxu0 0.0
    %132 = vmatpush1.msra.mxu0 0.0
    %133 = vmatprep.subr.mxu0 0.0
    %134 = vmatpush1.msra.mxu0 0.0
    %135 = vmatprep.subr.mxu0 0.0
    %136 = vmatpush1.msra.mxu0 0.0
    %137 = vmatprep.subr.mxu0 0.0
    %138 = vmatpush1.msra.mxu0 %v61
    %139 = vmatprep.subr.mxu0 0.0
    %140 = vmatpush1.msra.mxu0 %v60
    %141 = vmatprep.subr.mxu0 0.0
    %142 = vmatpush1.msra.mxu0 %v59
    %143 = vmatprep.subr.mxu0 0.0
    %144 = vmatpush2.msra.mxu0 0.0
    %145 = vmatprep.subr.mxu0 0.0
    %146 = vmatpush2.msra.mxu0 0.0
    %147 = vmatprep.subr.mxu0 0.0
    %148 = vmatpush2.msra.mxu0 0.0
    %149 = vmatprep.subr.mxu0 0.0
    %150 = vmatpush2.msra.mxu0 0.0
    %151 = vmatprep.subr.mxu0 0.0
    %152 = vmatpush2.msra.mxu0 0.0
    %153 = vmatprep.subr.mxu0 0.0
    %154 = vmatpush2.msra.mxu0 0.0
    %155 = vmatprep.subr.mxu0 0.0
    %156 = vmatpush2.msra.mxu0 0.0
    %157 = vmatprep.subr.mxu0 0.0
    %158 = vmatpush2.msra.mxu0 0.0
    %159 = vmatprep.subr.mxu0 0.0
    %160 = vmatpush2.msra.mxu0 0.0
    %161 = vmatprep.subr.mxu0 0.0
    %162 = vmatpush2.msra.mxu0 0.0
    %163 = vmatprep.subr.mxu0 0.0
    %164 = vmatpush2.msra.mxu0 0.0
    %165 = vmatprep.subr.mxu0 0.0
    %166 = vmatpush2.msra.mxu0 0.0
    %167 = vmatprep.subr.mxu0 0.0
    %168 = vmatpush2.msra.mxu0 0.0
    %169 = vmatprep.subr.mxu0 0.0
    %170 = vmatpush2.msra.mxu0 0.0
    %171 = vmatprep.subr.mxu0 0.0
    %172 = vmatpush2.msra.mxu0 0.0
    %173 = vmatprep.subr.mxu0 0.0
    %174 = vmatpush2.msra.mxu0 0.0
    %175 = vmatprep.mubr.f32.mxu0 0.0
    %176 = vmatmul.mubr.f32.gmra.mxu0 %v64
    %v177 = vpop.f32.mrf.mxu0
    %v178 = vadd.f32 0.0, %v177
    %v179 = vpop.f32.mrf.mxu0
    %180 = vmatprep.mubr.f32.mxu0 0.0
    %181 = vmatmul.mubr.f32.gmra.mxu0 %v67
    %v182 = vpop.f32.mrf.mxu0
    %v183 = vadd.f32 0.0, %v182
    %v184 = vpop.f32.mrf.mxu0
    %185 = vmatprep.mubr.f32.mxu0 0.0
    %186 = vmatmul.mubr.f32.gmra.mxu0 %v70
    %v187 = vpop.f32.mrf.mxu0
    %v188 = vadd.f32 0.0, %v187
    %v189 = vpop.f32.mrf.mxu0
    %190 = vmatprep.mubr.f32.mxu0 0.0
    %191 = vmatmul.mubr.f32.gmra.mxu0 %v73
    %v192 = vpop.f32.mrf.mxu0
    %v193 = vadd.f32 0.0, %v192
    %v194 = vpop.f32.mrf.mxu0
    %195 = vmatprep.mubr.f32.mxu0 0.0
    %196 = vmatmul.mubr.f32.gmra.mxu0 %v76
    %v197 = vpop.f32.mrf.mxu0
    %v198 = vadd.f32 0.0, %v197
    %v199 = vpop.f32.mrf.mxu0
    %200 = vmatprep.mubr.f32.mxu0 0.0
    %201 = vmatmul.mubr.f32.gmra.mxu0 %v79
    %v202 = vpop.f32.mrf.mxu0
    %v203 = vadd.f32 0.0, %v202
    %v204 = vpop.f32.mrf.mxu0
    %205 = vmatprep.mubr.f32.mxu0 0.0
    %206 = vmatmul.mubr.f32.gmra.mxu0 %v82
    %v207 = vpop.f32.mrf.mxu0
    %v208 = vadd.f32 0.0, %v207
    %v209 = vpop.f32.mrf.mxu0
    %210 = vmatprep.mubr.f32.mxu0 0.0
    %211 = vmatmul.mubr.f32.gmra.mxu0 %v85
    %v212 = vpop.f32.mrf.mxu0
    %v213 = vadd.f32 0.0, %v212
    %v214 = vpop.f32.mrf.mxu0
    %215 = vmatprep.mubr.f32.mxu0 0.0
    %216 = vmatmul.mubr.f32.gmra.mxu0 %v88
    %v217 = vpop.f32.mrf.mxu0
    %v218 = vadd.f32 0.0, %v217
    %v219 = vpop.f32.mrf.mxu0
    %220 = vmatprep.mubr.f32.mxu0 0.0
    %221 = vmatmul.mubr.f32.gmra.mxu0 %v91
    %v222 = vpop.f32.mrf.mxu0
    %v223 = vadd.f32 0.0, %v222
    %v224 = vpop.f32.mrf.mxu0
    %225 = vmatprep.mubr.f32.mxu0 0.0
    %226 = vmatmul.mubr.f32.gmra.mxu0 %v94
    %v227 = vpop.f32.mrf.mxu0
    %v228 = vadd.f32 0.0, %v227
    %v229 = vpop.f32.mrf.mxu0
    %230 = vmatprep.mubr.f32.mxu0 0.0
    %231 = vmatmul.mubr.f32.gmra.mxu0 %v97
    %v232 = vpop.f32.mrf.mxu0
    %v233 = vadd.f32 0.0, %v232
    %v234 = vpop.f32.mrf.mxu0
    %235 = vmatprep.mubr.f32.mxu0 0.0
    %236 = vmatmul.mubr.f32.gmra.mxu0 %v100
    %v237 = vpop.f32.mrf.mxu0
    %v238 = vadd.f32 0.0, %v237
    %v239 = vpop.f32.mrf.mxu0
    %240 = vmatprep.mubr.f32.mxu0 0.0
    %241 = vmatmul.mubr.f32.gmra.mxu0 %v103
    %v242 = vpop.f32.mrf.mxu0
    %v243 = vadd.f32 0.0, %v242
    %v244 = vpop.f32.mrf.mxu0
    %245 = vmatprep.mubr.f32.mxu0 0.0
    %246 = vmatmul.mubr.f32.gmra.mxu0 %v106
    %v247 = vpop.f32.mrf.mxu0
    %v248 = vadd.f32 0.0, %v247
    %v249 = vpop.f32.mrf.mxu0
    %250 = vmatprep.mubr.f32.mxu0 0.0
    %251 = vmatmul.mubr.f32.gmra.mxu0 %v109
    %v252 = vpop.f32.mrf.mxu0
    %v253 = vadd.f32 0.0, %v252
    %v254 = vpop.f32.mrf.mxu0
    %255 = vdwg.mxu0
    %v257 = vsel %vm62, %v24, 0
    %v260 = vsel %vm62, %v25, 0
    %v263 = vsel %vm62, %v26, 0
    %v266 = vsel %vm62, %v27, 0
    %v269 = vsel %vm62, %v28, 0
    %v272 = vsel %vm62, %v29, 0
    %v275 = vsel %vm62, %v30, 0
    %v278 = vsel %vm62, %v31, 0
    %v281 = vsel %vm62, %v32, 0
    %v284 = vsel %vm62, %v33, 0
    %v287 = vsel %vm62, %v34, 0
    %v290 = vsel %vm62, %v35, 0
    %v293 = vsel %vm62, %v36, 0
    %v296 = vsel %vm62, %v37, 0
    %v299 = vsel %vm62, %v38, 0
    %v302 = vsel %vm62, %v39, 0
    %304 = vmatprep.subr.mxu0 0.0
    %305 = vmatpush1.msra.mxu0 0.0
    %306 = vmatprep.subr.mxu0 0.0
    %307 = vmatpush1.msra.mxu0 0.0
    %308 = vmatprep.subr.mxu0 0.0
    %309 = vmatpush1.msra.mxu0 0.0
    %310 = vmatprep.subr.mxu0 0.0
    %311 = vmatpush1.msra.mxu0 0.0
    %312 = vmatprep.subr.mxu0 0.0
    %313 = vmatpush1.msra.mxu0 0.0
    %314 = vmatprep.subr.mxu0 0.0
    %315 = vmatpush1.msra.mxu0 0.0
    %316 = vmatprep.subr.mxu0 0.0
    %317 = vmatpush1.msra.mxu0 0.0
    %318 = vmatprep.subr.mxu0 0.0
    %319 = vmatpush1.msra.mxu0 0.0
    %320 = vmatprep.subr.mxu0 0.0
    %321 = vmatpush1.msra.mxu0 0.0
    %322 = vmatprep.subr.mxu0 0.0
    %323 = vmatpush1.msra.mxu0 0.0
    %324 = vmatprep.subr.mxu0 0.0
    %325 = vmatpush1.msra.mxu0 0.0
    %326 = vmatprep.subr.mxu0 0.0
    %327 = vmatpush1.msra.mxu0 0.0
    %328 = vmatprep.subr.mxu0 0.0
    %329 = vmatpush1.msra.mxu0 0.0
    %330 = vmatprep.subr.mxu0 0.0
    %331 = vmatpush1.msra.mxu0 %v42
    %332 = vmatprep.subr.mxu0 0.0
    %333 = vmatpush1.msra.mxu0 %v41
    %334 = vmatprep.subr.mxu0 0.0
    %335 = vmatpush1.msra.mxu0 %v40
    %336 = vmatprep.subr.mxu0 0.0
    %337 = vmatpush2.msra.mxu0 0.0
    %338 = vmatprep.subr.mxu0 0.0
    %339 = vmatpush2.msra.mxu0 0.0
    %340 = vmatprep.subr.mxu0 0.0
    %341 = vmatpush2.msra.mxu0 0.0
    %342 = vmatprep.subr.mxu0 0.0
    %343 = vmatpush2.msra.mxu0 0.0
    %344 = vmatprep.subr.mxu0 0.0
    %345 = vmatpush2.msra.mxu0 0.0
    %346 = vmatprep.subr.mxu0 0.0
    %347 = vmatpush2.msra.mxu0 0.0
    %348 = vmatprep.subr.mxu0 0.0
    %349 = vmatpush2.msra.mxu0 0.0
    %350 = vmatprep.subr.mxu0 0.0
    %351 = vmatpush2.msra.mxu0 0.0
    %352 = vmatprep.subr.mxu0 0.0
    %353 = vmatpush2.msra.mxu0 0.0
    %354 = vmatprep.subr.mxu0 0.0
    %355 = vmatpush2.msra.mxu0 0.0
    %356 = vmatprep.subr.mxu0 0.0
    %357 = vmatpush2.msra.mxu0 0.0
    %358 = vmatprep.subr.mxu0 0.0
    %359 = vmatpush2.msra.mxu0 0.0
    %360 = vmatprep.subr.mxu0 0.0
    %361 = vmatpush2.msra.mxu0 0.0
    %362 = vmatprep.subr.mxu0 0.0
    %363 = vmatpush2.msra.mxu0 0.0
    %364 = vmatprep.subr.mxu0 0.0
    %365 = vmatpush2.msra.mxu0 0.0
    %366 = vmatprep.subr.mxu0 0.0
    %367 = vmatpush2.msra.mxu0 0.0
    %368 = vmatprep.mubr.f32.mxu0 0.0
    %369 = vmatmul.mubr.f32.gmra.mxu0 %v257
    %v370 = vpop.f32.mrf.mxu0
    %v371 = vadd.f32 %v178, %v370
    %v372 = vpop.f32.mrf.mxu0
    %373 = vmatprep.mubr.f32.mxu0 0.0
    %374 = vmatmul.mubr.f32.gmra.mxu0 %v260
    %v375 = vpop.f32.mrf.mxu0
    %v376 = vadd.f32 %v183, %v375
    %v377 = vpop.f32.mrf.mxu0
    %378 = vmatprep.mubr.f32.mxu0 0.0
    %379 = vmatmul.mubr.f32.gmra.mxu0 %v263
    %v380 = vpop.f32.mrf.mxu0
    %v381 = vadd.f32 %v188, %v380
    %v382 = vpop.f32.mrf.mxu0
    %383 = vmatprep.mubr.f32.mxu0 0.0
    %384 = vmatmul.mubr.f32.gmra.mxu0 %v266
    %v385 = vpop.f32.mrf.mxu0
    %v386 = vadd.f32 %v193, %v385
    %v387 = vpop.f32.mrf.mxu0
    %388 = vmatprep.mubr.f32.mxu0 0.0
    %389 = vmatmul.mubr.f32.gmra.mxu0 %v269
    %v390 = vpop.f32.mrf.mxu0
    %v391 = vadd.f32 %v198, %v390
    %v392 = vpop.f32.mrf.mxu0
    %393 = vmatprep.mubr.f32.mxu0 0.0
    %394 = vmatmul.mubr.f32.gmra.mxu0 %v272
    %v395 = vpop.f32.mrf.mxu0
    %v396 = vadd.f32 %v203, %v395
    %v397 = vpop.f32.mrf.mxu0
    %398 = vmatprep.mubr.f32.mxu0 0.0
    %399 = vmatmul.mubr.f32.gmra.mxu0 %v275
    %v400 = vpop.f32.mrf.mxu0
    %v401 = vadd.f32 %v208, %v400
    %v402 = vpop.f32.mrf.mxu0
    %403 = vmatprep.mubr.f32.mxu0 0.0
    %404 = vmatmul.mubr.f32.gmra.mxu0 %v278
    %v405 = vpop.f32.mrf.mxu0
    %v406 = vadd.f32 %v213, %v405
    %v407 = vpop.f32.mrf.mxu0
    %408 = vmatprep.mubr.f32.mxu0 0.0
    %409 = vmatmul.mubr.f32.gmra.mxu0 %v281
    %v410 = vpop.f32.mrf.mxu0
    %v411 = vadd.f32 %v218, %v410
    %v412 = vpop.f32.mrf.mxu0
    %413 = vmatprep.mubr.f32.mxu0 0.0
    %414 = vmatmul.mubr.f32.gmra.mxu0 %v284
    %v415 = vpop.f32.mrf.mxu0
    %v416 = vadd.f32 %v223, %v415
    %v417 = vpop.f32.mrf.mxu0
    %418 = vmatprep.mubr.f32.mxu0 0.0
    %419 = vmatmul.mubr.f32.gmra.mxu0 %v287
    %v420 = vpop.f32.mrf.mxu0
    %v421 = vadd.f32 %v228, %v420
    %v422 = vpop.f32.mrf.mxu0
    %423 = vmatprep.mubr.f32.mxu0 0.0
    %424 = vmatmul.mubr.f32.gmra.mxu0 %v290
    %v425 = vpop.f32.mrf.mxu0
    %v426 = vadd.f32 %v233, %v425
    %v427 = vpop.f32.mrf.mxu0
    %428 = vmatprep.mubr.f32.mxu0 0.0
    %429 = vmatmul.mubr.f32.gmra.mxu0 %v293
    %v430 = vpop.f32.mrf.mxu0
    %v431 = vadd.f32 %v238, %v430
    %v432 = vpop.f32.mrf.mxu0
    %433 = vmatprep.mubr.f32.mxu0 0.0
    %434 = vmatmul.mubr.f32.gmra.mxu0 %v296
    %v435 = vpop.f32.mrf.mxu0
    %v436 = vadd.f32 %v243, %v435
    %v437 = vpop.f32.mrf.mxu0
    %438 = vmatprep.mubr.f32.mxu0 0.0
    %439 = vmatmul.mubr.f32.gmra.mxu0 %v299
    %v440 = vpop.f32.mrf.mxu0
    %v441 = vadd.f32 %v248, %v440
    %v442 = vpop.f32.mrf.mxu0
    %443 = vmatprep.mubr.f32.mxu0 0.0
    %444 = vmatmul.mubr.f32.gmra.mxu0 %v302
    %v445 = vpop.f32.mrf.mxu0
    %v446 = vadd.f32 %v253, %v445
    %v447 = vpop.f32.mrf.mxu0
    %448 = vdwg.mxu0
    %v449 = vld [vmem:[%s0 + $0x2] sm:$0xff]
    %v450 = vld [vmem:[%s0 + $0xa] sm:$0xff]
    %v451 = vld [vmem:[%s0 + $0x1a] sm:$0xff]
    %v452 = vld [vmem:[%s0 + $0x22] sm:$0xff]
    %v453 = vld [vmem:[%s0 + $0x32] sm:$0xff]
    %v454 = vld [vmem:[%s0 + $0x3a] sm:$0xff]
    %v455 = vld [vmem:[%s0 + $0x4a] sm:$0xff]
    %v456 = vld [vmem:[%s0 + $0x52] sm:$0xff]
    %v457 = vld [vmem:[%s0 + $0x62] sm:$0xff]
    %v458 = vld [vmem:[%s0 + $0x6a] sm:$0xff]
    %v459 = vld [vmem:[%s0 + $0x7a] sm:$0xff]
    %v460 = vld [vmem:[%s0 + $0x82] sm:$0xff]
    %v461 = vld [vmem:[%s0 + $0x92] sm:$0xff]
    %v462 = vld [vmem:[%s0 + $0x9a] sm:$0xff]
    %v463 = vld [vmem:[%s0 + $0xaa] sm:$0xff]
    %v464 = vld [vmem:[%s0 + $0xb2] sm:$0xff]
    %v465 = vld [vmem:[%s1 + $0x30] sm:$0xff]
    %v466 = vld [vmem:[%s1 + $0x38] sm:$0xff]
    %v467 = vld [vmem:[%s1 + $0x40] sm:$0xff]
    %v469 = vsel %vm62, %v449, 0
    %v472 = vsel %vm62, %v450, 0
    %v475 = vsel %vm62, %v451, 0
    %v478 = vsel %vm62, %v452, 0
    %v481 = vsel %vm62, %v453, 0
    %v484 = vsel %vm62, %v454, 0
    %v487 = vsel %vm62, %v455, 0
    %v490 = vsel %vm62, %v456, 0
    %v493 = vsel %vm62, %v457, 0
    %v496 = vsel %vm62, %v458, 0
    %v499 = vsel %vm62, %v459, 0
    %v502 = vsel %vm62, %v460, 0
    %v505 = vsel %vm62, %v461, 0
    %v508 = vsel %vm62, %v462, 0
    %v511 = vsel %vm62, %v463, 0
    %v514 = vsel %vm62, %v464, 0
    %516 = vmatprep.subr.mxu0 0.0
    %517 = vmatpush1.msra.mxu0 0.0
    %518 = vmatprep.subr.mxu0 0.0
    %519 = vmatpush1.msra.mxu0 0.0
    %520 = vmatprep.subr.mxu0 0.0
    %521 = vmatpush1.msra.mxu0 0.0
    %522 = vmatprep.subr.mxu0 0.0
    %523 = vmatpush1.msra.mxu0 0.0
    %524 = vmatprep.subr.mxu0 0.0
    %525 = vmatpush1.msra.mxu0 0.0
    %526 = vmatprep.subr.mxu0 0.0
    %527 = vmatpush1.msra.mxu0 0.0
    %528 = vmatprep.subr.mxu0 0.0
    %529 = vmatpush1.msra.mxu0 0.0
    %530 = vmatprep.subr.mxu0 0.0
    %531 = vmatpush1.msra.mxu0 0.0
    %532 = vmatprep.subr.mxu0 0.0
    %533 = vmatpush1.msra.mxu0 0.0
    %534 = vmatprep.subr.mxu0 0.0
    %535 = vmatpush1.msra.mxu0 0.0
    %536 = vmatprep.subr.mxu0 0.0
    %537 = vmatpush1.msra.mxu0 0.0
    %538 = vmatprep.subr.mxu0 0.0
    %539 = vmatpush1.msra.mxu0 0.0
    %540 = vmatprep.subr.mxu0 0.0
    %541 = vmatpush1.msra.mxu0 0.0
    %542 = vmatprep.subr.mxu0 0.0
    %543 = vmatpush1.msra.mxu0 %v467
    %544 = vmatprep.subr.mxu0 0.0
    %545 = vmatpush1.msra.mxu0 %v466
    %546 = vmatprep.subr.mxu0 0.0
    %547 = vmatpush1.msra.mxu0 %v465
    %548 = vmatprep.subr.mxu0 0.0
    %549 = vmatpush2.msra.mxu0 0.0
    %550 = vmatprep.subr.mxu0 0.0
    %551 = vmatpush2.msra.mxu0 0.0
    %552 = vmatprep.subr.mxu0 0.0
    %553 = vmatpush2.msra.mxu0 0.0
    %554 = vmatprep.subr.mxu0 0.0
    %555 = vmatpush2.msra.mxu0 0.0
    %556 = vmatprep.subr.mxu0 0.0
    %557 = vmatpush2.msra.mxu0 0.0
    %558 = vmatprep.subr.mxu0 0.0
    %559 = vmatpush2.msra.mxu0 0.0
    %560 = vmatprep.subr.mxu0 0.0
    %561 = vmatpush2.msra.mxu0 0.0
    %562 = vmatprep.subr.mxu0 0.0
    %563 = vmatpush2.msra.mxu0 0.0
    %564 = vmatprep.subr.mxu0 0.0
    %565 = vmatpush2.msra.mxu0 0.0
    %566 = vmatprep.subr.mxu0 0.0
    %567 = vmatpush2.msra.mxu0 0.0
    %568 = vmatprep.subr.mxu0 0.0
    %569 = vmatpush2.msra.mxu0 0.0
    %570 = vmatprep.subr.mxu0 0.0
    %571 = vmatpush2.msra.mxu0 0.0
    %572 = vmatprep.subr.mxu0 0.0
    %573 = vmatpush2.msra.mxu0 0.0
    %574 = vmatprep.subr.mxu0 0.0
    %575 = vmatpush2.msra.mxu0 0.0
    %576 = vmatprep.subr.mxu0 0.0
    %577 = vmatpush2.msra.mxu0 0.0
    %578 = vmatprep.subr.mxu0 0.0
    %579 = vmatpush2.msra.mxu0 0.0
    %580 = vmatprep.mubr.f32.mxu0 0.0
    %581 = vmatmul.mubr.f32.gmra.mxu0 %v469
    %v582 = vpop.f32.mrf.mxu0
    %v583 = vadd.f32 0.0, %v582
    %v584 = vpop.f32.mrf.mxu0
    %585 = vmatprep.mubr.f32.mxu0 0.0
    %586 = vmatmul.mubr.f32.gmra.mxu0 %v472
    %v587 = vpop.f32.mrf.mxu0
    %v588 = vadd.f32 0.0, %v587
    %v589 = vpop.f32.mrf.mxu0
    %590 = vmatprep.mubr.f32.mxu0 0.0
    %591 = vmatmul.mubr.f32.gmra.mxu0 %v475
    %v592 = vpop.f32.mrf.mxu0
    %v593 = vadd.f32 0.0, %v592
    %v594 = vpop.f32.mrf.mxu0
    %595 = vmatprep.mubr.f32.mxu0 0.0
    %596 = vmatmul.mubr.f32.gmra.mxu0 %v478
    %v597 = vpop.f32.mrf.mxu0
    %v598 = vadd.f32 0.0, %v597
    %v599 = vpop.f32.mrf.mxu0
    %600 = vmatprep.mubr.f32.mxu0 0.0
    %601 = vmatmul.mubr.f32.gmra.mxu0 %v481
    %v602 = vpop.f32.mrf.mxu0
    %v603 = vadd.f32 0.0, %v602
    %v604 = vpop.f32.mrf.mxu0
    %605 = vmatprep.mubr.f32.mxu0 0.0
    %606 = vmatmul.mubr.f32.gmra.mxu0 %v484
    %v607 = vpop.f32.mrf.mxu0
    %v608 = vadd.f32 0.0, %v607
    %v609 = vpop.f32.mrf.mxu0
    %610 = vmatprep.mubr.f32.mxu0 0.0
    %611 = vmatmul.mubr.f32.gmra.mxu0 %v487
    %v612 = vpop.f32.mrf.mxu0
    %v613 = vadd.f32 0.0, %v612
    %v614 = vpop.f32.mrf.mxu0
    %615 = vmatprep.mubr.f32.mxu0 0.0
    %616 = vmatmul.mubr.f32.gmra.mxu0 %v490
    %v617 = vpop.f32.mrf.mxu0
    %v618 = vadd.f32 0.0, %v617
    %v619 = vpop.f32.mrf.mxu0
    %620 = vmatprep.mubr.f32.mxu0 0.0
    %621 = vmatmul.mubr.f32.gmra.mxu0 %v493
    %v622 = vpop.f32.mrf.mxu0
    %v623 = vadd.f32 0.0, %v622
    %v624 = vpop.f32.mrf.mxu0
    %625 = vmatprep.mubr.f32.mxu0 0.0
    %626 = vmatmul.mubr.f32.gmra.mxu0 %v496
    %v627 = vpop.f32.mrf.mxu0
    %v628 = vadd.f32 0.0, %v627
    %v629 = vpop.f32.mrf.mxu0
    %630 = vmatprep.mubr.f32.mxu0 0.0
    %631 = vmatmul.mubr.f32.gmra.mxu0 %v499
    %v632 = vpop.f32.mrf.mxu0
    %v633 = vadd.f32 0.0, %v632
    %v634 = vpop.f32.mrf.mxu0
    %635 = vmatprep.mubr.f32.mxu0 0.0
    %636 = vmatmul.mubr.f32.gmra.mxu0 %v502
    %v637 = vpop.f32.mrf.mxu0
    %v638 = vadd.f32 0.0, %v637
    %v639 = vpop.f32.mrf.mxu0
    %640 = vmatprep.mubr.f32.mxu0 0.0
    %641 = vmatmul.mubr.f32.gmra.mxu0 %v505
    %v642 = vpop.f32.mrf.mxu0
    %v643 = vadd.f32 0.0, %v642
    %v644 = vpop.f32.mrf.mxu0
    %645 = vmatprep.mubr.f32.mxu0 0.0
    %646 = vmatmul.mubr.f32.gmra.mxu0 %v508
    %v647 = vpop.f32.mrf.mxu0
    %v648 = vadd.f32 0.0, %v647
    %v649 = vpop.f32.mrf.mxu0
    %650 = vmatprep.mubr.f32.mxu0 0.0
    %651 = vmatmul.mubr.f32.gmra.mxu0 %v511
    %v652 = vpop.f32.mrf.mxu0
    %v653 = vadd.f32 0.0, %v652
    %v654 = vpop.f32.mrf.mxu0
    %655 = vmatprep.mubr.f32.mxu0 0.0
    %656 = vmatmul.mubr.f32.gmra.mxu0 %v514
    %v657 = vpop.f32.mrf.mxu0
    %v658 = vadd.f32 0.0, %v657
    %v659 = vpop.f32.mrf.mxu0
    %660 = vdwg.mxu0
    %v661 = vadd.f32 %v371, %v583
    %v662 = vadd.f32 %v376, %v588
    %v663 = vadd.f32 %v381, %v593
    %v664 = vadd.f32 %v386, %v598
    %v665 = vadd.f32 %v391, %v603
    %v666 = vadd.f32 %v396, %v608
    %v667 = vadd.f32 %v401, %v613
    %v668 = vadd.f32 %v406, %v618
    %v669 = vadd.f32 %v411, %v623
    %v670 = vadd.f32 %v416, %v628
    %v671 = vadd.f32 %v421, %v633
    %v672 = vadd.f32 %v426, %v638
    %v673 = vadd.f32 %v431, %v643
    %v674 = vadd.f32 %v436, %v648
    %v675 = vadd.f32 %v441, %v653
    %v676 = vadd.f32 %v446, %v658
    %v677 = vld [vmem:[%s2] sm:$0x1]
    %v679 = vlaneseq
    %v680 = vshrl.u32 %v679, 7
    %v681 = vsub.s32 0, %v680
    %v682 = vrot.slane %v677, %v681
    %v684 = vadd.f32 %v661, %v682
    %v685 = vadd.f32 %v662, %v682
    %v686 = vadd.f32 %v663, %v682
    %v687 = vadd.f32 %v664, %v682
    %v688 = vadd.f32 %v665, %v682
    %v689 = vadd.f32 %v666, %v682
    %v690 = vadd.f32 %v667, %v682
    %v691 = vadd.f32 %v668, %v682
    %v692 = vadd.f32 %v669, %v682
    %v693 = vadd.f32 %v670, %v682
    %v694 = vadd.f32 %v671, %v682
    %v695 = vadd.f32 %v672, %v682
    %v696 = vadd.f32 %v673, %v682
    %v697 = vadd.f32 %v674, %v682
    %v698 = vadd.f32 %v675, %v682
    %v699 = vadd.f32 %v676, %v682
    %v700 = vld [vmem:[%s3] sm:$0xff]
    %v701 = vld [vmem:[%s3 + $0x8] sm:$0xff]
    %v702 = vld [vmem:[%s3 + $0x10] sm:$0xff]
    %v703 = vld [vmem:[%s3 + $0x18] sm:$0xff]
    %v704 = vld [vmem:[%s3 + $0x20] sm:$0xff]
    %v705 = vld [vmem:[%s3 + $0x28] sm:$0xff]
    %v706 = vld [vmem:[%s3 + $0x30] sm:$0xff]
    %v707 = vld [vmem:[%s3 + $0x38] sm:$0xff]
    %v708 = vld [vmem:[%s3 + $0x40] sm:$0xff]
    %v709 = vld [vmem:[%s3 + $0x48] sm:$0xff]
    %v710 = vld [vmem:[%s3 + $0x50] sm:$0xff]
    %v711 = vld [vmem:[%s3 + $0x58] sm:$0xff]
    %v712 = vld [vmem:[%s3 + $0x60] sm:$0xff]
    %v713 = vld [vmem:[%s3 + $0x68] sm:$0xff]
    %v714 = vld [vmem:[%s3 + $0x70] sm:$0xff]
    %v715 = vld [vmem:[%s3 + $0x78] sm:$0xff]
    %vm716 = vcmp.gt.f32.partialorder %v700, 0.0
    %vm717 = vcmp.gt.f32.partialorder %v701, 0.0
    %vm718 = vcmp.gt.f32.partialorder %v702, 0.0
    %vm719 = vcmp.gt.f32.partialorder %v703, 0.0
    %vm720 = vcmp.gt.f32.partialorder %v704, 0.0
    %vm721 = vcmp.gt.f32.partialorder %v705, 0.0
    %vm722 = vcmp.gt.f32.partialorder %v706, 0.0
    %vm723 = vcmp.gt.f32.partialorder %v707, 0.0
    %vm724 = vcmp.gt.f32.partialorder %v708, 0.0
    %vm725 = vcmp.gt.f32.partialorder %v709, 0.0
    %vm726 = vcmp.gt.f32.partialorder %v710, 0.0
    %vm727 = vcmp.gt.f32.partialorder %v711, 0.0
    %vm728 = vcmp.gt.f32.partialorder %v712, 0.0
    %vm729 = vcmp.gt.f32.partialorder %v713, 0.0
    %vm730 = vcmp.gt.f32.partialorder %v714, 0.0
    %vm731 = vcmp.gt.f32.partialorder %v715, 0.0
    %v732 = vsel %vm716, 1, 0
    %v733 = vsel %vm717, 1, 0
    %v734 = vsel %vm718, 1, 0
    %v735 = vsel %vm719, 1, 0
    %v736 = vsel %vm720, 1, 0
    %v737 = vsel %vm721, 1, 0
    %v738 = vsel %vm722, 1, 0
    %v739 = vsel %vm723, 1, 0
    %v740 = vsel %vm724, 1, 0
    %v741 = vsel %vm725, 1, 0
    %v742 = vsel %vm726, 1, 0
    %v743 = vsel %vm727, 1, 0
    %v744 = vsel %vm728, 1, 0
    %v745 = vsel %vm729, 1, 0
    %v746 = vsel %vm730, 1, 0
    %v747 = vsel %vm731, 1, 0
    %748 = vset.pattern.permute.xlu0 0
    %749 = vperm.xlu0 %748, %v732
    %v750 = vpop.permute.xlu0 %749
    %751 = vset.pattern.permute.xlu0 0
    %752 = vperm.xlu0 %751, %v733
    %v753 = vpop.permute.xlu0 %752
    %754 = vset.pattern.permute.xlu0 0
    %755 = vperm.xlu0 %754, %v734
    %v756 = vpop.permute.xlu0 %755
    %757 = vset.pattern.permute.xlu0 0
    %758 = vperm.xlu0 %757, %v735
    %v759 = vpop.permute.xlu0 %758
    %760 = vset.pattern.permute.xlu0 0
    %761 = vperm.xlu0 %760, %v736
    %v762 = vpop.permute.xlu0 %761
    %763 = vset.pattern.permute.xlu0 0
    %764 = vperm.xlu0 %763, %v737
    %v765 = vpop.permute.xlu0 %764
    %766 = vset.pattern.permute.xlu0 0
    %767 = vperm.xlu0 %766, %v738
    %v768 = vpop.permute.xlu0 %767
    %769 = vset.pattern.permute.xlu0 0
    %770 = vperm.xlu0 %769, %v739
    %v771 = vpop.permute.xlu0 %770
    %772 = vset.pattern.permute.xlu0 0
    %773 = vperm.xlu0 %772, %v740
    %v774 = vpop.permute.xlu0 %773
    %775 = vset.pattern.permute.xlu0 0
    %776 = vperm.xlu0 %775, %v741
    %v777 = vpop.permute.xlu0 %776
    %778 = vset.pattern.permute.xlu0 0
    %779 = vperm.xlu0 %778, %v742
    %v780 = vpop.permute.xlu0 %779
    %781 = vset.pattern.permute.xlu0 0
    %782 = vperm.xlu0 %781, %v743
    %v783 = vpop.permute.xlu0 %782
    %784 = vset.pattern.permute.xlu0 0
    %785 = vperm.xlu0 %784, %v744
    %v786 = vpop.permute.xlu0 %785
    %787 = vset.pattern.permute.xlu0 0
    %788 = vperm.xlu0 %787, %v745
    %v789 = vpop.permute.xlu0 %788
    %790 = vset.pattern.permute.xlu0 0
    %791 = vperm.xlu0 %790, %v746
    %v792 = vpop.permute.xlu0 %791
    %793 = vset.pattern.permute.xlu0 0
    %794 = vperm.xlu0 %793, %v747
    %v795 = vpop.permute.xlu0 %794
    %vm796 = vcmp.eq.s32.totalorder %v750, 1
    %vm797 = vcmp.eq.s32.totalorder %v753, 1
    %vm798 = vcmp.eq.s32.totalorder %v756, 1
    %vm799 = vcmp.eq.s32.totalorder %v759, 1
    %vm800 = vcmp.eq.s32.totalorder %v762, 1
    %vm801 = vcmp.eq.s32.totalorder %v765, 1
    %vm802 = vcmp.eq.s32.totalorder %v768, 1
    %vm803 = vcmp.eq.s32.totalorder %v771, 1
    %vm804 = vcmp.eq.s32.totalorder %v774, 1
    %vm805 = vcmp.eq.s32.totalorder %v777, 1
    %vm806 = vcmp.eq.s32.totalorder %v780, 1
    %vm807 = vcmp.eq.s32.totalorder %v783, 1
    %vm808 = vcmp.eq.s32.totalorder %v786, 1
    %vm809 = vcmp.eq.s32.totalorder %v789, 1
    %vm810 = vcmp.eq.s32.totalorder %v792, 1
    %vm811 = vcmp.eq.s32.totalorder %v795, 1
    %v812 = vsel %vm796, %v684, -1e+30
    %v813 = vsel %vm797, %v685, -1e+30
    %v814 = vsel %vm798, %v686, -1e+30
    %v815 = vsel %vm799, %v687, -1e+30
    %v816 = vsel %vm800, %v688, -1e+30
    %v817 = vsel %vm801, %v689, -1e+30
    %v818 = vsel %vm802, %v690, -1e+30
    %v819 = vsel %vm803, %v691, -1e+30
    %v820 = vsel %vm804, %v692, -1e+30
    %v821 = vsel %vm805, %v693, -1e+30
    %v822 = vsel %vm806, %v694, -1e+30
    %v823 = vsel %vm807, %v695, -1e+30
    %v824 = vsel %vm808, %v696, -1e+30
    %v825 = vsel %vm809, %v697, -1e+30
    %v826 = vsel %vm810, %v698, -1e+30
    %v827 = vsel %vm811, %v699, -1e+30
    %vm828 = vcmask 261120
    %v829 = vsel %vm828, %v812, -inf
    %v830 = vsel %vm828, %v813, -inf
    %v831 = vmax.f32 %v829, %v830
    %v832 = vrot.slane %v831, 4
    %v833 = vmax.f32 %v831, %v832
    %v834 = vrot.slane %v833, 2
    %v835 = vmax.f32 %v833, %v834
    %v836 = vrot.slane %v835, 1
    %v837 = vmax.f32 %v835, %v836
    %v838 = vsel %vm828, %v814, -inf
    %v839 = vsel %vm828, %v815, -inf
    %v840 = vmax.f32 %v838, %v839
    %v841 = vrot.slane %v840, 4
    %v842 = vmax.f32 %v840, %v841
    %v843 = vrot.slane %v842, 2
    %v844 = vmax.f32 %v842, %v843
    %v845 = vrot.slane %v844, 1
    %v846 = vmax.f32 %v844, %v845
    %v847 = vsel %vm828, %v816, -inf
    %v848 = vsel %vm828, %v817, -inf
    %v849 = vmax.f32 %v847, %v848
    %v850 = vrot.slane %v849, 4
    %v851 = vmax.f32 %v849, %v850
    %v852 = vrot.slane %v851, 2
    %v853 = vmax.f32 %v851, %v852
    %v854 = vrot.slane %v853, 1
    %v855 = vmax.f32 %v853, %v854
    %v856 = vsel %vm828, %v818, -inf
    %v857 = vsel %vm828, %v819, -inf
    %v858 = vmax.f32 %v856, %v857
    %v859 = vrot.slane %v858, 4
    %v860 = vmax.f32 %v858, %v859
    %v861 = vrot.slane %v860, 2
    %v862 = vmax.f32 %v860, %v861
    %v863 = vrot.slane %v862, 1
    %v864 = vmax.f32 %v862, %v863
    %v865 = vsel %vm828, %v820, -inf
    %v866 = vsel %vm828, %v821, -inf
    %v867 = vmax.f32 %v865, %v866
    %v868 = vrot.slane %v867, 4
    %v869 = vmax.f32 %v867, %v868
    %v870 = vrot.slane %v869, 2
    %v871 = vmax.f32 %v869, %v870
    %v872 = vrot.slane %v871, 1
    %v873 = vmax.f32 %v871, %v872
    %v874 = vsel %vm828, %v822, -inf
    %v875 = vsel %vm828, %v823, -inf
    %v876 = vmax.f32 %v874, %v875
    %v877 = vrot.slane %v876, 4
    %v878 = vmax.f32 %v876, %v877
    %v879 = vrot.slane %v878, 2
    %v880 = vmax.f32 %v878, %v879
    %v881 = vrot.slane %v880, 1
    %v882 = vmax.f32 %v880, %v881
    %v883 = vsel %vm828, %v824, -inf
    %v884 = vsel %vm828, %v825, -inf
    %v885 = vmax.f32 %v883, %v884
    %v886 = vrot.slane %v885, 4
    %v887 = vmax.f32 %v885, %v886
    %v888 = vrot.slane %v887, 2
    %v889 = vmax.f32 %v887, %v888
    %v890 = vrot.slane %v889, 1
    %v891 = vmax.f32 %v889, %v890
    %v892 = vsel %vm828, %v826, -inf
    %v893 = vsel %vm828, %v827, -inf
    %v894 = vmax.f32 %v892, %v893
    %v895 = vrot.slane %v894, 4
    %v896 = vmax.f32 %v894, %v895
    %v897 = vrot.slane %v896, 2
    %v898 = vmax.f32 %v896, %v897
    %v899 = vrot.slane %v898, 1
    %v900 = vmax.f32 %v898, %v899
    %901 = vset.pattern.permute.xlu0 1
    %902 = vperm.xlu0 %901, %v732
    %v903 = vpop.permute.xlu0 %902
    %904 = vset.pattern.permute.xlu0 1
    %905 = vperm.xlu0 %904, %v733
    %v906 = vpop.permute.xlu0 %905
    %907 = vset.pattern.permute.xlu0 1
    %908 = vperm.xlu0 %907, %v734
    %v909 = vpop.permute.xlu0 %908
    %910 = vset.pattern.permute.xlu0 1
    %911 = vperm.xlu0 %910, %v735
    %v912 = vpop.permute.xlu0 %911
    %913 = vset.pattern.permute.xlu0 1
    %914 = vperm.xlu0 %913, %v736
    %v915 = vpop.permute.xlu0 %914
    %916 = vset.pattern.permute.xlu0 1
    %917 = vperm.xlu0 %916, %v737
    %v918 = vpop.permute.xlu0 %917
    %919 = vset.pattern.permute.xlu0 1
    %920 = vperm.xlu0 %919, %v738
    %v921 = vpop.permute.xlu0 %920
    %922 = vset.pattern.permute.xlu0 1
    %923 = vperm.xlu0 %922, %v739
    %v924 = vpop.permute.xlu0 %923
    %925 = vset.pattern.permute.xlu0 1
    %926 = vperm.xlu0 %925, %v740
    %v927 = vpop.permute.xlu0 %926
    %928 = vset.pattern.permute.xlu0 1
    %929 = vperm.xlu0 %928, %v741
    %v930 = vpop.permute.xlu0 %929
    %931 = vset.pattern.permute.xlu0 1
    %932 = vperm.xlu0 %931, %v742
    %v933 = vpop.permute.xlu0 %932
    %934 = vset.pattern.permute.xlu0 1
    %935 = vperm.xlu0 %934, %v743
    %v936 = vpop.permute.xlu0 %935
    %937 = vset.pattern.permute.xlu0 1
    %938 = vperm.xlu0 %937, %v744
    %v939 = vpop.permute.xlu0 %938
    %940 = vset.pattern.permute.xlu0 1
    %941 = vperm.xlu0 %940, %v745
    %v942 = vpop.permute.xlu0 %941
    %943 = vset.pattern.permute.xlu0 1
    %944 = vperm.xlu0 %943, %v746
    %v945 = vpop.permute.xlu0 %944
    %946 = vset.pattern.permute.xlu0 1
    %947 = vperm.xlu0 %946, %v747
    %v948 = vpop.permute.xlu0 %947
    %vm949 = vcmp.eq.s32.totalorder %v903, 1
    %vm950 = vcmp.eq.s32.totalorder %v906, 1
    %vm951 = vcmp.eq.s32.totalorder %v909, 1
    %vm952 = vcmp.eq.s32.totalorder %v912, 1
    %vm953 = vcmp.eq.s32.totalorder %v915, 1
    %vm954 = vcmp.eq.s32.totalorder %v918, 1
    %vm955 = vcmp.eq.s32.totalorder %v921, 1
    %vm956 = vcmp.eq.s32.totalorder %v924, 1
    %vm957 = vcmp.eq.s32.totalorder %v927, 1
    %vm958 = vcmp.eq.s32.totalorder %v930, 1
    %vm959 = vcmp.eq.s32.totalorder %v933, 1
    %vm960 = vcmp.eq.s32.totalorder %v936, 1
    %vm961 = vcmp.eq.s32.totalorder %v939, 1
    %vm962 = vcmp.eq.s32.totalorder %v942, 1
    %vm963 = vcmp.eq.s32.totalorder %v945, 1
    %vm964 = vcmp.eq.s32.totalorder %v948, 1
    %v965 = vsel %vm949, %v684, -1e+30
    %v966 = vsel %vm950, %v685, -1e+30
    %v967 = vsel %vm951, %v686, -1e+30
    %v968 = vsel %vm952, %v687, -1e+30
    %v969 = vsel %vm953, %v688, -1e+30
    %v970 = vsel %vm954, %v689, -1e+30
    %v971 = vsel %vm955, %v690, -1e+30
    %v972 = vsel %vm956, %v691, -1e+30
    %v973 = vsel %vm957, %v692, -1e+30
    %v974 = vsel %vm958, %v693, -1e+30
    %v975 = vsel %vm959, %v694, -1e+30
    %v976 = vsel %vm960, %v695, -1e+30
    %v977 = vsel %vm961, %v696, -1e+30
    %v978 = vsel %vm962, %v697, -1e+30
    %v979 = vsel %vm963, %v698, -1e+30
    %v980 = vsel %vm964, %v699, -1e+30
    %v981 = vsel %vm828, %v965, -inf
    %v982 = vsel %vm828, %v966, -inf
    %v983 = vmax.f32 %v981, %v982
    %v984 = vrot.slane %v983, 4
    %v985 = vmax.f32 %v983, %v984
    %v986 = vrot.slane %v985, 2
    %v987 = vmax.f32 %v985, %v986
    %v988 = vrot.slane %v987, 1
    %v989 = vmax.f32 %v987, %v988
    %v990 = vsel %vm828, %v967, -inf
    %v991 = vsel %vm828, %v968, -inf
    %v992 = vmax.f32 %v990, %v991
    %v993 = vrot.slane %v992, 4
    %v994 = vmax.f32 %v992, %v993
    %v995 = vrot.slane %v994, 2
    %v996 = vmax.f32 %v994, %v995
    %v997 = vrot.slane %v996, 1
    %v998 = vmax.f32 %v996, %v997
    %v999 = vsel %vm828, %v969, -inf
    %v1000 = vsel %vm828, %v970, -inf
    %v1001 = vmax.f32 %v999, %v1000
    %v1002 = vrot.slane %v1001, 4
    %v1003 = vmax.f32 %v1001, %v1002
    %v1004 = vrot.slane %v1003, 2
    %v1005 = vmax.f32 %v1003, %v1004
    %v1006 = vrot.slane %v1005, 1
    %v1007 = vmax.f32 %v1005, %v1006
    %v1008 = vsel %vm828, %v971, -inf
    %v1009 = vsel %vm828, %v972, -inf
    %v1010 = vmax.f32 %v1008, %v1009
    %v1011 = vrot.slane %v1010, 4
    %v1012 = vmax.f32 %v1010, %v1011
    %v1013 = vrot.slane %v1012, 2
    %v1014 = vmax.f32 %v1012, %v1013
    %v1015 = vrot.slane %v1014, 1
    %v1016 = vmax.f32 %v1014, %v1015
    %v1017 = vsel %vm828, %v973, -inf
    %v1018 = vsel %vm828, %v974, -inf
    %v1019 = vmax.f32 %v1017, %v1018
    %v1020 = vrot.slane %v1019, 4
    %v1021 = vmax.f32 %v1019, %v1020
    %v1022 = vrot.slane %v1021, 2
    %v1023 = vmax.f32 %v1021, %v1022
    %v1024 = vrot.slane %v1023, 1
    %v1025 = vmax.f32 %v1023, %v1024
    %v1026 = vsel %vm828, %v975, -inf
    %v1027 = vsel %vm828, %v976, -inf
    %v1028 = vmax.f32 %v1026, %v1027
    %v1029 = vrot.slane %v1028, 4
    %v1030 = vmax.f32 %v1028, %v1029
    %v1031 = vrot.slane %v1030, 2
    %v1032 = vmax.f32 %v1030, %v1031
    %v1033 = vrot.slane %v1032, 1
    %v1034 = vmax.f32 %v1032, %v1033
    %v1035 = vsel %vm828, %v977, -inf
    %v1036 = vsel %vm828, %v978, -inf
    %v1037 = vmax.f32 %v1035, %v1036
    %v1038 = vrot.slane %v1037, 4
    %v1039 = vmax.f32 %v1037, %v1038
    %v1040 = vrot.slane %v1039, 2
    %v1041 = vmax.f32 %v1039, %v1040
    %v1042 = vrot.slane %v1041, 1
    %v1043 = vmax.f32 %v1041, %v1042
    %v1044 = vsel %vm828, %v979, -inf
    %v1045 = vsel %vm828, %v980, -inf
    %v1046 = vmax.f32 %v1044, %v1045
    %v1047 = vrot.slane %v1046, 4
    %v1048 = vmax.f32 %v1046, %v1047
    %v1049 = vrot.slane %v1048, 2
    %v1050 = vmax.f32 %v1048, %v1049
    %v1051 = vrot.slane %v1050, 1
    %v1052 = vmax.f32 %v1050, %v1051
    %1053 = vset.pattern.permute.xlu0 2
    %1054 = vperm.xlu0 %1053, %v732
    %v1055 = vpop.permute.xlu0 %1054
    %1056 = vset.pattern.permute.xlu0 2
    %1057 = vperm.xlu0 %1056, %v733
    %v1058 = vpop.permute.xlu0 %1057
    %1059 = vset.pattern.permute.xlu0 2
    %1060 = vperm.xlu0 %1059, %v734
    %v1061 = vpop.permute.xlu0 %1060
    %1062 = vset.pattern.permute.xlu0 2
    %1063 = vperm.xlu0 %1062, %v735
    %v1064 = vpop.permute.xlu0 %1063
    %1065 = vset.pattern.permute.xlu0 2
    %1066 = vperm.xlu0 %1065, %v736
    %v1067 = vpop.permute.xlu0 %1066
    %1068 = vset.pattern.permute.xlu0 2
    %1069 = vperm.xlu0 %1068, %v737
    %v1070 = vpop.permute.xlu0 %1069
    %1071 = vset.pattern.permute.xlu0 2
    %1072 = vperm.xlu0 %1071, %v738
    %v1073 = vpop.permute.xlu0 %1072
    %1074 = vset.pattern.permute.xlu0 2
    %1075 = vperm.xlu0 %1074, %v739
    %v1076 = vpop.permute.xlu0 %1075
    %1077 = vset.pattern.permute.xlu0 2
    %1078 = vperm.xlu0 %1077, %v740
    %v1079 = vpop.permute.xlu0 %1078
    %1080 = vset.pattern.permute.xlu0 2
    %1081 = vperm.xlu0 %1080, %v741
    %v1082 = vpop.permute.xlu0 %1081
    %1083 = vset.pattern.permute.xlu0 2
    %1084 = vperm.xlu0 %1083, %v742
    %v1085 = vpop.permute.xlu0 %1084
    %1086 = vset.pattern.permute.xlu0 2
    %1087 = vperm.xlu0 %1086, %v743
    %v1088 = vpop.permute.xlu0 %1087
    %1089 = vset.pattern.permute.xlu0 2
    %1090 = vperm.xlu0 %1089, %v744
    %v1091 = vpop.permute.xlu0 %1090
    %1092 = vset.pattern.permute.xlu0 2
    %1093 = vperm.xlu0 %1092, %v745
    %v1094 = vpop.permute.xlu0 %1093
    %1095 = vset.pattern.permute.xlu0 2
    %1096 = vperm.xlu0 %1095, %v746
    %v1097 = vpop.permute.xlu0 %1096
    %1098 = vset.pattern.permute.xlu0 2
    %1099 = vperm.xlu0 %1098, %v747
    %v1100 = vpop.permute.xlu0 %1099
    %vm1101 = vcmp.eq.s32.totalorder %v1055, 1
    %vm1102 = vcmp.eq.s32.totalorder %v1058, 1
    %vm1103 = vcmp.eq.s32.totalorder %v1061, 1
    %vm1104 = vcmp.eq.s32.totalorder %v1064, 1
    %vm1105 = vcmp.eq.s32.totalorder %v1067, 1
    %vm1106 = vcmp.eq.s32.totalorder %v1070, 1
    %vm1107 = vcmp.eq.s32.totalorder %v1073, 1
    %vm1108 = vcmp.eq.s32.totalorder %v1076, 1
    %vm1109 = vcmp.eq.s32.totalorder %v1079, 1
    %vm1110 = vcmp.eq.s32.totalorder %v1082, 1
    %vm1111 = vcmp.eq.s32.totalorder %v1085, 1
    %vm1112 = vcmp.eq.s32.totalorder %v1088, 1
    %vm1113 = vcmp.eq.s32.totalorder %v1091, 1
    %vm1114 = vcmp.eq.s32.totalorder %v1094, 1
    %vm1115 = vcmp.eq.s32.totalorder %v1097, 1
    %vm1116 = vcmp.eq.s32.totalorder %v1100, 1
    %v1117 = vsel %vm1101, %v684, -1e+30
    %v1118 = vsel %vm1102, %v685, -1e+30
    %v1119 = vsel %vm1103, %v686, -1e+30
    %v1120 = vsel %vm1104, %v687, -1e+30
    %v1121 = vsel %vm1105, %v688, -1e+30
    %v1122 = vsel %vm1106, %v689, -1e+30
    %v1123 = vsel %vm1107, %v690, -1e+30
    %v1124 = vsel %vm1108, %v691, -1e+30
    %v1125 = vsel %vm1109, %v692, -1e+30
    %v1126 = vsel %vm1110, %v693, -1e+30
    %v1127 = vsel %vm1111, %v694, -1e+30
    %v1128 = vsel %vm1112, %v695, -1e+30
    %v1129 = vsel %vm1113, %v696, -1e+30
    %v1130 = vsel %vm1114, %v697, -1e+30
    %v1131 = vsel %vm1115, %v698, -1e+30
    %v1132 = vsel %vm1116, %v699, -1e+30
    %v1133 = vsel %vm828, %v1117, -inf
    %v1134 = vsel %vm828, %v1118, -inf
    %v1135 = vmax.f32 %v1133, %v1134
    %v1136 = vrot.slane %v1135, 4
    %v1137 = vmax.f32 %v1135, %v1136
    %v1138 = vrot.slane %v1137, 2
    %v1139 = vmax.f32 %v1137, %v1138
    %v1140 = vrot.slane %v1139, 1
    %v1141 = vmax.f32 %v1139, %v1140
    %v1142 = vsel %vm828, %v1119, -inf
    %v1143 = vsel %vm828, %v1120, -inf
    %v1144 = vmax.f32 %v1142, %v1143
    %v1145 = vrot.slane %v1144, 4
    %v1146 = vmax.f32 %v1144, %v1145
    %v1147 = vrot.slane %v1146, 2
    %v1148 = vmax.f32 %v1146, %v1147
    %v1149 = vrot.slane %v1148, 1
    %v1150 = vmax.f32 %v1148, %v1149
    %v1151 = vsel %vm828, %v1121, -inf
    %v1152 = vsel %vm828, %v1122, -inf
    %v1153 = vmax.f32 %v1151, %v1152
    %v1154 = vrot.slane %v1153, 4
    %v1155 = vmax.f32 %v1153, %v1154
    %v1156 = vrot.slane %v1155, 2
    %v1157 = vmax.f32 %v1155, %v1156
    %v1158 = vrot.slane %v1157, 1
    %v1159 = vmax.f32 %v1157, %v1158
    %v1160 = vsel %vm828, %v1123, -inf
    %v1161 = vsel %vm828, %v1124, -inf
    %v1162 = vmax.f32 %v1160, %v1161
    %v1163 = vrot.slane %v1162, 4
    %v1164 = vmax.f32 %v1162, %v1163
    %v1165 = vrot.slane %v1164, 2
    %v1166 = vmax.f32 %v1164, %v1165
    %v1167 = vrot.slane %v1166, 1
    %v1168 = vmax.f32 %v1166, %v1167
    %v1169 = vsel %vm828, %v1125, -inf
    %v1170 = vsel %vm828, %v1126, -inf
    %v1171 = vmax.f32 %v1169, %v1170
    %v1172 = vrot.slane %v1171, 4
    %v1173 = vmax.f32 %v1171, %v1172
    %v1174 = vrot.slane %v1173, 2
    %v1175 = vmax.f32 %v1173, %v1174
    %v1176 = vrot.slane %v1175, 1
    %v1177 = vmax.f32 %v1175, %v1176
    %v1178 = vsel %vm828, %v1127, -inf
    %v1179 = vsel %vm828, %v1128, -inf
    %v1180 = vmax.f32 %v1178, %v1179
    %v1181 = vrot.slane %v1180, 4
    %v1182 = vmax.f32 %v1180, %v1181
    %v1183 = vrot.slane %v1182, 2
    %v1184 = vmax.f32 %v1182, %v1183
    %v1185 = vrot.slane %v1184, 1
    %v1186 = vmax.f32 %v1184, %v1185
    %v1187 = vsel %vm828, %v1129, -inf
    %v1188 = vsel %vm828, %v1130, -inf
    %v1189 = vmax.f32 %v1187, %v1188
    %v1190 = vrot.slane %v1189, 4
    %v1191 = vmax.f32 %v1189, %v1190
    %v1192 = vrot.slane %v1191, 2
    %v1193 = vmax.f32 %v1191, %v1192
    %v1194 = vrot.slane %v1193, 1
    %v1195 = vmax.f32 %v1193, %v1194
    %v1196 = vsel %vm828, %v1131, -inf
    %v1197 = vsel %vm828, %v1132, -inf
    %v1198 = vmax.f32 %v1196, %v1197
    %v1199 = vrot.slane %v1198, 4
    %v1200 = vmax.f32 %v1198, %v1199
    %v1201 = vrot.slane %v1200, 2
    %v1202 = vmax.f32 %v1200, %v1201
    %v1203 = vrot.slane %v1202, 1
    %v1204 = vmax.f32 %v1202, %v1203
    %vm1213 = vcmask 1041409
    %v1214 = vsel %vm1213, %v846, %v837
    %vm1215 = vcmask 1042434
    %v1216 = vsel %vm1215, %v855, %v1214
    %vm1217 = vcmask 1043459
    %v1218 = vsel %vm1217, %v864, %v1216
    %vm1219 = vcmask 1044484
    %v1220 = vsel %vm1219, %v873, %v1218
    %vm1221 = vcmask 1045509
    %v1222 = vsel %vm1221, %v882, %v1220
    %vm1223 = vcmask 1046534
    %v1224 = vsel %vm1223, %v891, %v1222
    %vm1225 = vcmask 1047559
    %v1226 = vsel %vm1225, %v900, %v1224
    %v1236 = vsel %vm1213, %v998, %v989
    %v1237 = vsel %vm1215, %v1007, %v1236
    %v1238 = vsel %vm1217, %v1016, %v1237
    %v1239 = vsel %vm1219, %v1025, %v1238
    %v1240 = vsel %vm1221, %v1034, %v1239
    %v1241 = vsel %vm1223, %v1043, %v1240
    %v1242 = vsel %vm1225, %v1052, %v1241
    %1243 = vrot.lane.b32.xlu0 %v1242, 32
    %v1244 = vpop.permute.xlu0 %1243
    %v1254 = vsel %vm1213, %v1150, %v1141
    %v1255 = vsel %vm1215, %v1159, %v1254
    %v1256 = vsel %vm1217, %v1168, %v1255
    %v1257 = vsel %vm1219, %v1177, %v1256
    %v1258 = vsel %vm1221, %v1186, %v1257
    %v1259 = vsel %vm1223, %v1195, %v1258
    %v1260 = vsel %vm1225, %v1204, %v1259
    %1261 = vrot.lane.b32.xlu0 %v1260, 64
    %v1262 = vpop.permute.xlu0 %1261
    %v1264 = vsel %vm828, %v1226, %v1244
    %vm1265 = vcmask 523264
    %v1266 = vsel %vm1265, %v1264, %v1262
    %v1267 = vmax.f32 %v1266, 0.0
    %v1268 = vld [vmem:[%s4] sm:$0xff]
    %v1269 = vld [vmem:[%s4 + $0x8] sm:$0xff]
    %v1270 = vld [vmem:[%s4 + $0x10] sm:$0xff]
    %v1271 = vld [vmem:[%s4 + $0x18] sm:$0xff]
    %v1272 = vld [vmem:[%s4 + $0x20] sm:$0xff]
    %v1273 = vld [vmem:[%s4 + $0x28] sm:$0xff]
    %v1274 = vld [vmem:[%s4 + $0x30] sm:$0xff]
    %v1275 = vld [vmem:[%s4 + $0x38] sm:$0xff]
    %v1276 = vld [vmem:[%s4 + $0x40] sm:$0xff]
    %v1277 = vld [vmem:[%s4 + $0x48] sm:$0xff]
    %v1278 = vld [vmem:[%s4 + $0x50] sm:$0xff]
    %v1279 = vld [vmem:[%s4 + $0x58] sm:$0xff]
    %vm1280 = vcmask 785408
    %v1282 = vsel %vm1280, %v1267, 0
    %1284 = vmatprep.subr.mxu0 0.0
    %1285 = vmatpush1.msra.mxu0 0.0
    %1286 = vmatprep.subr.mxu0 0.0
    %1287 = vmatpush1.msra.mxu0 0.0
    %1288 = vmatprep.subr.mxu0 0.0
    %1289 = vmatpush1.msra.mxu0 0.0
    %1290 = vmatprep.subr.mxu0 0.0
    %1291 = vmatpush1.msra.mxu0 0.0
    %1292 = vmatprep.subr.mxu0 0.0
    %1293 = vmatpush1.msra.mxu0 %v1279
    %1294 = vmatprep.subr.mxu0 0.0
    %1295 = vmatpush1.msra.mxu0 %v1278
    %1296 = vmatprep.subr.mxu0 0.0
    %1297 = vmatpush1.msra.mxu0 %v1277
    %1298 = vmatprep.subr.mxu0 0.0
    %1299 = vmatpush1.msra.mxu0 %v1276
    %1300 = vmatprep.subr.mxu0 0.0
    %1301 = vmatpush1.msra.mxu0 %v1275
    %1302 = vmatprep.subr.mxu0 0.0
    %1303 = vmatpush1.msra.mxu0 %v1274
    %1304 = vmatprep.subr.mxu0 0.0
    %1305 = vmatpush1.msra.mxu0 %v1273
    %1306 = vmatprep.subr.mxu0 0.0
    %1307 = vmatpush1.msra.mxu0 %v1272
    %1308 = vmatprep.subr.mxu0 0.0
    %1309 = vmatpush1.msra.mxu0 %v1271
    %1310 = vmatprep.subr.mxu0 0.0
    %1311 = vmatpush1.msra.mxu0 %v1270
    %1312 = vmatprep.subr.mxu0 0.0
    %1313 = vmatpush1.msra.mxu0 %v1269
    %1314 = vmatprep.subr.mxu0 0.0
    %1315 = vmatpush1.msra.mxu0 %v1268
    %1316 = vmatprep.subr.mxu0 0.0
    %1317 = vmatpush2.msra.mxu0 0.0
    %1318 = vmatprep.subr.mxu0 0.0
    %1319 = vmatpush2.msra.mxu0 0.0
    %1320 = vmatprep.subr.mxu0 0.0
    %1321 = vmatpush2.msra.mxu0 0.0
    %1322 = vmatprep.subr.mxu0 0.0
    %1323 = vmatpush2.msra.mxu0 0.0
    %1324 = vmatprep.subr.mxu0 0.0
    %1325 = vmatpush2.msra.mxu0 0.0
    %1326 = vmatprep.subr.mxu0 0.0
    %1327 = vmatpush2.msra.mxu0 0.0
    %1328 = vmatprep.subr.mxu0 0.0
    %1329 = vmatpush2.msra.mxu0 0.0
    %1330 = vmatprep.subr.mxu0 0.0
    %1331 = vmatpush2.msra.mxu0 0.0
    %1332 = vmatprep.subr.mxu0 0.0
    %1333 = vmatpush2.msra.mxu0 0.0
    %1334 = vmatprep.subr.mxu0 0.0
    %1335 = vmatpush2.msra.mxu0 0.0
    %1336 = vmatprep.subr.mxu0 0.0
    %1337 = vmatpush2.msra.mxu0 0.0
    %1338 = vmatprep.subr.mxu0 0.0
    %1339 = vmatpush2.msra.mxu0 0.0
    %1340 = vmatprep.subr.mxu0 0.0
    %1341 = vmatpush2.msra.mxu0 0.0
    %1342 = vmatprep.subr.mxu0 0.0
    %1343 = vmatpush2.msra.mxu0 0.0
    %1344 = vmatprep.subr.mxu0 0.0
    %1345 = vmatpush2.msra.mxu0 0.0
    %1346 = vmatprep.subr.mxu0 0.0
    %1347 = vmatpush2.msra.mxu0 0.0
    %1348 = vmatprep.mubr.f32.mxu0 0.0
    %1349 = vmatmul.mubr.f32.gmra.mxu0 %v1282
    %v1350 = vpop.f32.mrf.mxu0
    %v1351 = vadd.f32 0.0, %v1350
    %v1352 = vpop.f32.mrf.mxu0
    %1353 = vdwg.mxu0
    %v1354 = vld [vmem:[%s5] sm:$0x1]
    %vm1355 = vcmask 27648
    %v1356 = vsel %vm1355, %v1351, -inf
    %v1357 = vrot.slane %v1356, 4
    %v1358 = vmax.f32 %v1356, %v1357
    %v1359 = vrot.slane %v1358, 2
    %v1360 = vmax.f32 %v1358, %v1359
    %v1361 = vrot.slane %v1360, 1
    %v1362 = vmax.f32 %v1360, %v1361
    %v1363 = vsub.f32 %v1351, %v1362
    %v1364 = vmul.f32 %v1363, 1.442695
    %v1365 = vpow.pop %v1364
    %v1366 = vsel %vm1355, %v1365, 0.0
    %v1367 = vrot.slane %v1366, 4
    %v1368 = vadd.f32 %v1366, %v1367
    %v1369 = vrot.slane %v1368, 2
    %v1370 = vadd.f32 %v1368, %v1369
    %v1371 = vrot.slane %v1370, 1
    %v1372 = vadd.f32 %v1370, %v1371
    %v1373 = vrcp.pop %v1372
    %v1374 = vmul.f32 %v1365, %v1373
    %v1375 = vmul.f32 %v1374, %v1351
    %v1376 = vsel %vm1355, %v1375, 0.0
    %v1377 = vrot.slane %v1376, 4
    %v1378 = vadd.f32 %v1376, %v1377
    %v1379 = vrot.slane %v1378, 2
    %v1380 = vadd.f32 %v1378, %v1379
    %v1381 = vrot.slane %v1380, 1
    %v1382 = vadd.f32 %v1380, %v1381
    %v1383 = vadd.f32 %v1382, %v1354
    %vm1384 = vcmask 31748
    %v1385 = vsel %vm1384, %v1351, -inf
    %v1386 = vrot.slane %v1385, 4
    %v1387 = vmax.f32 %v1385, %v1386
    %v1388 = vrot.slane %v1387, 2
    %v1389 = vmax.f32 %v1387, %v1388
    %v1390 = vrot.slane %v1389, 1
    %v1391 = vmax.f32 %v1389, %v1390
    %v1392 = vsub.f32 %v1351, %v1391
    %v1393 = vmul.f32 %v1392, 1.442695
    %v1394 = vpow.pop %v1393
    %v1396 = vrot.slane %v1394, 4
    %v1398 = vsel %vm1355, %v1396, 0.0
    %v1399 = vrot.slane %v1398, 4
    %v1400 = vadd.f32 %v1398, %v1399
    %v1401 = vrot.slane %v1400, 2
    %v1402 = vadd.f32 %v1400, %v1401
    %v1403 = vrot.slane %v1402, 1
    %v1404 = vadd.f32 %v1402, %v1403
    %v1405 = vrcp.pop %v1404
    %v1406 = vmul.f32 %v1394, %v1405
    %v1407 = vmul.f32 %v1406, %v1351
    %v1409 = vrot.slane %v1407, 4
    %v1411 = vsel %vm1355, %v1409, 0.0
    %v1412 = vrot.slane %v1411, 4
    %v1413 = vadd.f32 %v1411, %v1412
    %v1414 = vrot.slane %v1413, 2
    %v1415 = vadd.f32 %v1413, %v1414
    %v1416 = vrot.slane %v1415, 1
    %v1417 = vadd.f32 %v1415, %v1416
    %v1418 = vadd.f32 %v1417, %v1354
    %v1420 = vrot.slane %v1418, 7
    %vm1422 = vcmask 1040384
    %v1423 = vsel %vm1422, %v1383, %v1420
    %vm1424 = vcmask 25600
    %1425 = vst.msk [vmem:[#allocation2] sm:$0x3] %vm1424, %v1423
    // Predicated region
    $region26: #{model_forward.1} parent=1 // pred_check
      _
    $region27: #{model_forward.1} parent=1 // pred_check_branch
      %1427 = sbr.rel (0) target = $region29
    $region28: #{model_forward.1} parent=1 // pred_region
      %s1429 = ssub.s32 32, 32
      %1430 = vsyncadd [#allocation3], %s1429
      %s1432 = sshll.u32 [#allocation2], 4
      %s1433 = int_to_ptr.vmem [resolvable:$true] %s1432
      %1435 = dma.vmem_to_hbm [thread:$0]  %s1433, 32, %s6, [#allocation3]
    $region29: #{model_forward.1} parent=1 // pred_fallthru
      _
    // Predicated region
    $region30: #{model_forward.1} parent=1 // pred_check
      _
    $region31: #{model_forward.1} parent=1 // pred_check_branch
      %1437 = sbr.rel (0) target = $region33
    $region32: #{model_forward.1} parent=1 // pred_region
      %1438 = dma.done [#allocation3], 32
    $region33: #{model_forward.1} parent=1 // pred_fallthru
      _
    %1439 = vsyncpa [#allocation3], 1

</llo_original>
